<compile_context>
chip_gen: v5e
topology: v5e:2x2
jax: 0.10.0
libtpu: 0.0.40
codegen_flags: <defaults>
</compile_context>

<pallas_src>
import functools

import jax
import jax.numpy as jnp
import numpy as np
from jax.experimental import pallas as pl
from jax.experimental.pallas import tpu as pltpu


def _round_up(v, m):
    return (v + m - 1) // m * m


def _vmem_capacity_bytes():
    try:
        cap = int(getattr(pltpu.get_tpu_info(), "vmem_capacity_bytes", 0))
        if cap > 0:
            return cap
    except Exception:
        pass
    return 64 * 1024 * 1024  # conservative fallback (v7x-sized per-core VMEM)


def _fused_conv_bn_hswish_kernel(
        x_ref,       # (B_TILE, Cin_p, P)   mxu dtype  (flattened activations)
        w_ref,       # (Cout_p, K_p)        mxu dtype  (tap-major, channel-minor)
        mask_ref,    # (T, 1, P)            mxu dtype  0/1 border masks ("same" padding)
        gamma_ref,   # (Cout_p, 1) f32
        beta_ref,    # (Cout_p, 1) f32
        out_ref,     # (B_TILE, Cout, P)    f32        (lane-dense: trailing dim = H*W)
        y_ref,       # VMEM (N, Cout_p, P)  conv result, resident across the grid
        sum_ref,     # VMEM (Cout_p, 1) f32 per-channel sum
        csq_ref,     # VMEM (Cout_p, 1) f32 per-channel centered sum of squares
        mean_ref,    # VMEM (Cout_p, 1) f32
        scale_ref,   # VMEM (Cout_p, 1) f32
        shift_ref,   # VMEM (Cout_p, 1) f32
        *, b_tile, shifts, count, eps):
    phase = pl.program_id(0)   # 0 = conv + sum, 1 = centered sumsq, 2 = normalize + act
    b = pl.program_id(1)       # batch-tile index
    start = pl.multiple_of(b * b_tile, b_tile)

    @pl.when(phase == 0)
    def _conv_and_sum():
        @pl.when(b == 0)
        def _init():
            sum_ref[...] = jnp.zeros_like(sum_ref)
            csq_ref[...] = jnp.zeros_like(csq_ref)

        x = x_ref[...]                                        # (B_TILE, Cin_p, P)
        # In-kernel im2col: each conv tap is a static roll of the flattened H*W axis plus
        # a 0/1 border mask (implements the implicit zero padding; masked positions are
        # exactly those whose rolled source wrapped around or fell outside the image).
        cols = []
        for t, s in enumerate(shifts):
            shifted = x if s == 0 else jnp.roll(x, s, axis=2)
            cols.append(shifted * mask_ref[t])                # (B_TILE, Cin_p, P)
        patches = jnp.concatenate(cols, axis=1)               # (B_TILE, K_p, P)
        # Single K = KH*KW*Cin_pad contraction per image, batched over the tile (one MXU
        # einsum per grid step; f32 accumulation).
        w = jnp.broadcast_to(w_ref[...], (b_tile,) + tuple(w_ref.shape))
        y = jnp.einsum('bok,bkp->bop', w, patches,
                       preferred_element_type=jnp.float32)    # (B_TILE, Cout_p, P) f32
        y_ref[pl.ds(start, b_tile), :, :] = y.astype(y_ref.dtype)
        sum_ref[...] += jnp.sum(jnp.sum(y, axis=2, keepdims=True), axis=0)

    @pl.when(phase == 1)
    def _centered_sumsq():
        @pl.when(b == 0)
        def _mean():
            mean_ref[...] = sum_ref[...] * (1.0 / count)

        y = y_ref[pl.ds(start, b_tile), :, :].astype(jnp.float32)
        d = y - mean_ref[...]
        csq_ref[...] += jnp.sum(jnp.sum(d * d, axis=2, keepdims=True), axis=0)

    @pl.when(phase == 2)
    def _normalize_activate():
        @pl.when(b == 0)
        def _finalize():
            var = csq_ref[...] * (1.0 / count)                # biased batch variance
            scale = gamma_ref[...] * jax.lax.rsqrt(var + eps)
            scale_ref[...] = scale
            shift_ref[...] = beta_ref[...] - mean_ref[...] * scale

        y = y_ref[pl.ds(start, b_tile), :, :].astype(jnp.float32)
        z = y * scale_ref[...] + shift_ref[...]               # per-channel BN affine
        act = z * jnp.clip(z + 3.0, 0.0, 6.0) * (1.0 / 6.0)   # Hardswish
        out_ref[...] = act[:, :out_ref.shape[1], :].astype(out_ref.dtype)


def conv_bn_hardswish(x_nchw, w_oihw, gamma, beta, *, eps=1e-5, mxu_dtype=jnp.bfloat16):
    """ConvBNActivation forward.  x: (N, Cin, H, W), w: (Cout, Cin, KH, KW) -> (N, Cout, H, W)."""
    N, Cin, H, W = x_nchw.shape
    Cout, cin_w, KH, KW = w_oihw.shape
    assert cin_w == Cin
    pad = (KH - 1) // 2
    P = H * W
    T = KH * KW
    # TODO(synk): only stride=1, groups=1, odd kernel ("same" padding) are supported --
    # the module's defaults.

    mxu_bytes = jnp.dtype(mxu_dtype).itemsize
    sub_pack = 8 * (4 // mxu_bytes)            # sublane pack: 16 for bf16, 8 for f32
    cin_p = _round_up(Cin, sub_pack)
    cout_p = _round_up(Cout, 8)
    k_p = T * cin_p

    # Activations: flatten H*W (lane-dense), cast to the MXU dtype before any layout
    # work, zero-pad channels to the sublane pack.
    x_flat = x_nchw.astype(mxu_dtype).reshape(N, Cin, P)
    if cin_p != Cin:
        x_flat = jnp.pad(x_flat, ((0, 0), (0, cin_p - Cin), (0, 0)))

    # Weights: (Cout_p, K_p) with the contraction ordered tap-major / channel-minor to
    # match the in-kernel concatenation of the KH*KW shifted copies.
    w_t = jnp.transpose(w_oihw.astype(mxu_dtype), (0, 2, 3, 1))      # (Cout, KH, KW, Cin)
    w_t = jnp.pad(w_t, ((0, cout_p - Cout), (0, 0), (0, 0), (0, cin_p - Cin)))
    w_mat = w_t.reshape(cout_p, k_p)

    gamma_p = jnp.pad(gamma.astype(jnp.float32), (0, cout_p - Cout)).reshape(cout_p, 1)
    beta_p = jnp.pad(beta.astype(jnp.float32), (0, cout_p - Cout)).reshape(cout_p, 1)

    # Static per-tap lane shifts and 0/1 border masks ("same" zero padding).
    hh, ww = np.divmod(np.arange(P), W)
    shifts, masks = [], []
    for kh in range(KH):
        for kw in range(KW):
            dh, dw = kh - pad, kw - pad
            shifts.append(int(-(dh * W + dw)))   # shifted[p] = x[p + dh*W + dw]
            masks.append((hh + dh >= 0) & (hh + dh < H) & (ww + dw >= 0) & (ww + dw < W))
    mask_arr = jnp.asarray(np.stack(masks).reshape(T, 1, P), dtype=mxu_dtype)
    shifts = tuple(shifts)

    # ---- generation-aware VMEM budgeting ------------------------------------------------
    vmem = _vmem_capacity_bytes()
    y_dtype = jnp.float32
    if N * cout_p * P * 4 > 0.4 * vmem:          # halve resident footprint on small-VMEM parts
        y_dtype = jnp.bfloat16
    y_bytes = jnp.dtype(y_dtype).itemsize
    resident = (N * cout_p * P * y_bytes         # resident conv-result scratch
                + 2 * cout_p * k_p * mxu_bytes   # weights (double-buffered)
                + 2 * T * P * mxu_bytes          # border masks
                + 16 * cout_p * 4)               # gamma/beta + stat scratches
    # TODO(synk): if the resident conv scratch alone exceeds VMEM, spill it to HBM instead
    # (phase 0 writes out_ref, aliased back for phases 1/2 via input_output_aliases).

    budget = int(0.7 * vmem)

    def _step_bytes(bt):
        blocks = 2 * bt * cin_p * P * mxu_bytes + 2 * bt * cout_p * P * 4
        temps = bt * P * (2 * k_p * mxu_bytes + cout_p * 4)   # taps + patches + f32 result
        return blocks + temps

    b_tile = 1
    for cand in range(N, 0, -1):
        if N % cand == 0 and resident + _step_bytes(cand) <= budget:
            b_tile = cand
            break
    nb = N // b_tile
    vmem_limit = int(min(vmem, 128 * 1024 * 1024) * 0.9)

    # ---- phase-aware index maps ----------------------------------------------------------
    def x_index(p, b):
        # Activations are only consumed in phase 0; afterwards keep mapping to the last
        # block so the pipeline never re-DMAs them (revisit rule -> no index change).
        return (jnp.where(p == 0, b, nb - 1), 0, 0)

    def out_index(p, b):
        # The output is only produced in phase 2; keep the earlier phases parked on block 0
        # so no untouched block is ever written back to HBM.
        return (jnp.where(p == 2, b, 0), 0, 0)

    kern = functools.partial(_fused_conv_bn_hswish_kernel,
                             b_tile=b_tile, shifts=shifts,
                             count=float(N * H * W), eps=float(eps))
    out = pl.pallas_call(
        kern,
        out_shape=jax.ShapeDtypeStruct((N, Cout, P), jnp.float32),
        grid_spec=pltpu.PrefetchScalarGridSpec(
            num_scalar_prefetch=0,
            grid=(3, nb),                                            # (phase, batch tile)
            in_specs=[
                pl.BlockSpec((b_tile, cin_p, P), x_index),           # activations
                pl.BlockSpec((cout_p, k_p), lambda p, b: (0, 0)),    # conv weights (resident)
                pl.BlockSpec((T, 1, P), lambda p, b: (0, 0, 0)),     # border masks (resident)
                pl.BlockSpec((cout_p, 1), lambda p, b: (0, 0)),      # BN gamma
                pl.BlockSpec((cout_p, 1), lambda p, b: (0, 0)),      # BN beta
            ],
            out_specs=pl.BlockSpec((b_tile, Cout, P), out_index),
            scratch_shapes=[
                pltpu.VMEM((N, cout_p, P), y_dtype),      # resident conv output
                pltpu.VMEM((cout_p, 1), jnp.float32),     # channel sum
                pltpu.VMEM((cout_p, 1), jnp.float32),     # centered sum of squares
                pltpu.VMEM((cout_p, 1), jnp.float32),     # mean
                pltpu.VMEM((cout_p, 1), jnp.float32),     # BN scale
                pltpu.VMEM((cout_p, 1), jnp.float32),     # BN shift
            ]),
        compiler_params=pltpu.CompilerParams(
            # The phase axis must run in order and the batch axis carries resident
            # accumulators, so both are sequential.
            # TODO(synk): on dual-TensorCore parts (v7x) split the batch axis across cores
            # (core_map + per-core partial sums reduced via a core barrier) for ~2x.
            dimension_semantics=("arbitrary", "arbitrary"),
            vmem_limit_bytes=vmem_limit),
    )(x_flat, w_mat, mask_arr, gamma_p, beta_p)

    return out.reshape(N, Cout, H, W)   # already NCHW -- no output transpose


def _reference(x_nchw, w_oihw, gamma, beta, eps=1e-5):
    y = jax.lax.conv_general_dilated(
        x_nchw.astype(jnp.float32), w_oihw.astype(jnp.float32),
        window_strides=(1, 1), padding="SAME",
        dimension_numbers=("NCHW", "OIHW", "NCHW"),
        precision=jax.lax.Precision.HIGHEST)
    mean = y.mean(axis=(0, 2, 3), keepdims=True)
    var = y.var(axis=(0, 2, 3), keepdims=True)
    z = (y - mean) * jax.lax.rsqrt(var + eps) * gamma.reshape(1, -1, 1, 1) \
        + beta.reshape(1, -1, 1, 1)
    return z * jnp.clip(z + 3.0, 0.0, 6.0) / 6.0


if __name__ == "__main__":
    key = jax.random.PRNGKey(0)
    k_x, k_w, k_g, k_b = jax.random.split(key, 4)

    N, Cin, Cout, H, W, Ksz = 2, 4, 8, 16, 16, 3
    x = jax.random.normal(k_x, (N, Cin, H, W), jnp.float32)
    w = jax.random.normal(k_w, (Cout, Cin, Ksz, Ksz), jnp.float32) * 0.1   # conv weight (no bias)
    gamma = 1.0 + 0.1 * jax.random.normal(k_g, (Cout,), jnp.float32)       # BN weight
    beta = 0.1 * jax.random.normal(k_b, (Cout,), jnp.float32)              # BN bias

    out = jax.block_until_ready(conv_bn_hardswish(x, w, gamma, beta))
    ref = jax.block_until_ready(_reference(x, w, gamma, beta))

    assert out.shape == (N, Cout, H, W)
    np.testing.assert_allclose(np.asarray(out), np.asarray(ref), rtol=1e-2, atol=1e-2)

    print("KERNEL_OK")
</pallas_src>

<mosaic_0001>
module attributes {stable_mosaic.version = 11 : i64} {
  func.func @_fused_conv_bn_hswish_kernel(%arg0: i32, %arg1: i32, %arg2: memref<2x16x256xbf16, #tpu.memory_space<vmem>>, %arg3: memref<8x144xbf16, #tpu.memory_space<vmem>>, %arg4: memref<9x1x256xbf16, #tpu.memory_space<vmem>>, %arg5: memref<8x1xf32, #tpu.memory_space<vmem>>, %arg6: memref<8x1xf32, #tpu.memory_space<vmem>>, %arg7: memref<2x8x256xf32, #tpu.memory_space<vmem>>, %arg8: memref<2x8x256xf32, #tpu.memory_space<vmem>>, %arg9: memref<8x1xf32, #tpu.memory_space<vmem>>, %arg10: memref<8x1xf32, #tpu.memory_space<vmem>>, %arg11: memref<8x1xf32, #tpu.memory_space<vmem>>, %arg12: memref<8x1xf32, #tpu.memory_space<vmem>>, %arg13: memref<8x1xf32, #tpu.memory_space<vmem>>) attributes {dimension_semantics = [#tpu.dimension_semantics<arbitrary>, #tpu.dimension_semantics<arbitrary>], iteration_bounds = array<i64: 3, 1>, scalar_prefetch = 0 : i64, scratch_operands = 6 : i64, tpu.core_type = #tpu.core_type<tc>, window_params = [{transform_indices = @transform_0, window_bounds = array<i64: 2, 16, 256>}, {pipeline_mode = #tpu.pipeline_mode<synchronous>, transform_indices = @transform_1, window_bounds = array<i64: 8, 144>}, {pipeline_mode = #tpu.pipeline_mode<synchronous>, transform_indices = @transform_2, window_bounds = array<i64: 9, 1, 256>}, {pipeline_mode = #tpu.pipeline_mode<synchronous>, transform_indices = @transform_3, window_bounds = array<i64: 8, 1>}, {pipeline_mode = #tpu.pipeline_mode<synchronous>, transform_indices = @transform_4, window_bounds = array<i64: 8, 1>}, {transform_indices = @transform_5, window_bounds = array<i64: 2, 8, 256>}]} {
    %c2_i32 = arith.constant 2 : i32
    %0 = arith.muli %arg1, %c2_i32 : i32
    %1 = tpu.assume_multiple %0, 2 : i32
    %c0_i32 = arith.constant 0 : i32
    %2 = arith.cmpi eq, %arg0, %c0_i32 : i32
    %3 = arith.extui %2 : i1 to i32
    %c0_i32_0 = arith.constant 0 : i32
    %4 = arith.cmpi ne, %3, %c0_i32_0 : i32
    scf.if %4 {
      %c0_i32_4 = arith.constant 0 : i32
      %11 = arith.cmpi eq, %arg1, %c0_i32_4 : i32
      %12 = arith.extui %11 : i1 to i32
      %c0_i32_5 = arith.constant 0 : i32
      %13 = arith.cmpi ne, %12, %c0_i32_5 : i32
      scf.if %13 {
        %cst_37 = arith.constant 0.000000e+00 : f32
        %97 = vector.broadcast %cst_37 : f32 to vector<8x1xf32>
        %c0_38 = arith.constant 0 : index
        %c0_39 = arith.constant 0 : index
        %98 = vector.load %arg9[%c0_38, %c0_39] : memref<8x1xf32, #tpu.memory_space<vmem>>, vector<8x1xf32>
        tpu.vector_store %arg9[%c0_38, %c0_39], %97 {strides = array<i32>} : memref<8x1xf32, #tpu.memory_space<vmem>>, vector<8x1xf32>,
        %cst_40 = arith.constant 0.000000e+00 : f32
        %99 = vector.broadcast %cst_40 : f32 to vector<8x1xf32>
        %c0_41 = arith.constant 0 : index
        %c0_42 = arith.constant 0 : index
        %100 = vector.load %arg10[%c0_41, %c0_42] : memref<8x1xf32, #tpu.memory_space<vmem>>, vector<8x1xf32>
        tpu.vector_store %arg10[%c0_41, %c0_42], %99 {strides = array<i32>} : memref<8x1xf32, #tpu.memory_space<vmem>>, vector<8x1xf32>,
      } else {
      }
      %c0 = arith.constant 0 : index
      %c0_6 = arith.constant 0 : index
      %c0_7 = arith.constant 0 : index
      %14 = vector.load %arg2[%c0, %c0_6, %c0_7] : memref<2x16x256xbf16, #tpu.memory_space<vmem>>, vector<2x16x256xbf16>
      %15 = vector.extract_strided_slice %14 {offsets = [0, 0, 239], sizes = [2, 16, 17], strides = [1, 1, 1]} : vector<2x16x256xbf16> to vector<2x16x17xbf16>
      %16 = vector.extract_strided_slice %14 {offsets = [0, 0, 0], sizes = [2, 16, 239], strides = [1, 1, 1]} : vector<2x16x256xbf16> to vector<2x16x239xbf16>
      %17 = tpu.concatenate %15, %16 in 2 : vector<2x16x17xbf16>, vector<2x16x239xbf16> -> vector<2x16x256xbf16>
      %c0_8 = arith.constant 0 : index
      %c0_9 = arith.constant 0 : index
      %c0_10 = arith.constant 0 : index
      %18 = vector.load %arg4[%c0_8, %c0_9, %c0_10] : memref<9x1x256xbf16, #tpu.memory_space<vmem>>, vector<1x1x256xbf16>
      %19 = vector.shape_cast %18 : vector<1x1x256xbf16> to vector<1x256xbf16>
      %20 = vector.shape_cast %19 : vector<1x256xbf16> to vector<1x1x256xbf16>
      %21 = vector.broadcast %20 : vector<1x1x256xbf16> to vector<2x16x256xbf16>
      %22 = arith.mulf %17, %21 : vector<2x16x256xbf16>
      %23 = vector.extract_strided_slice %14 {offsets = [0, 0, 240], sizes = [2, 16, 16], strides = [1, 1, 1]} : vector<2x16x256xbf16> to vector<2x16x16xbf16>
      %24 = vector.extract_strided_slice %14 {offsets = [0, 0, 0], sizes = [2, 16, 240], strides = [1, 1, 1]} : vector<2x16x256xbf16> to vector<2x16x240xbf16>
      %25 = tpu.concatenate %23, %24 in 2 : vector<2x16x16xbf16>, vector<2x16x240xbf16> -> vector<2x16x256xbf16>
      %c1 = arith.constant 1 : index
      %c0_11 = arith.constant 0 : index
      %c0_12 = arith.constant 0 : index
      %26 = vector.load %arg4[%c1, %c0_11, %c0_12] : memref<9x1x256xbf16, #tpu.memory_space<vmem>>, vector<1x1x256xbf16>
      %27 = vector.shape_cast %26 : vector<1x1x256xbf16> to vector<1x256xbf16>
      %28 = vector.shape_cast %27 : vector<1x256xbf16> to vector<1x1x256xbf16>
      %29 = vector.broadcast %28 : vector<1x1x256xbf16> to vector<2x16x256xbf16>
      %30 = arith.mulf %25, %29 : vector<2x16x256xbf16>
      %31 = vector.extract_strided_slice %14 {offsets = [0, 0, 241], sizes = [2, 16, 15], strides = [1, 1, 1]} : vector<2x16x256xbf16> to vector<2x16x15xbf16>
      %32 = vector.extract_strided_slice %14 {offsets = [0, 0, 0], sizes = [2, 16, 241], strides = [1, 1, 1]} : vector<2x16x256xbf16> to vector<2x16x241xbf16>
      %33 = tpu.concatenate %31, %32 in 2 : vector<2x16x15xbf16>, vector<2x16x241xbf16> -> vector<2x16x256xbf16>
      %c2 = arith.constant 2 : index
      %c0_13 = arith.constant 0 : index
      %c0_14 = arith.constant 0 : index
      %34 = vector.load %arg4[%c2, %c0_13, %c0_14] : memref<9x1x256xbf16, #tpu.memory_space<vmem>>, vector<1x1x256xbf16>
      %35 = vector.shape_cast %34 : vector<1x1x256xbf16> to vector<1x256xbf16>
      %36 = vector.shape_cast %35 : vector<1x256xbf16> to vector<1x1x256xbf16>
      %37 = vector.broadcast %36 : vector<1x1x256xbf16> to vector<2x16x256xbf16>
      %38 = arith.mulf %33, %37 : vector<2x16x256xbf16>
      %39 = vector.extract_strided_slice %14 {offsets = [0, 0, 255], sizes = [2, 16, 1], strides = [1, 1, 1]} : vector<2x16x256xbf16> to vector<2x16x1xbf16>
      %40 = vector.extract_strided_slice %14 {offsets = [0, 0, 0], sizes = [2, 16, 255], strides = [1, 1, 1]} : vector<2x16x256xbf16> to vector<2x16x255xbf16>
      %41 = tpu.concatenate %39, %40 in 2 : vector<2x16x1xbf16>, vector<2x16x255xbf16> -> vector<2x16x256xbf16>
      %c3 = arith.constant 3 : index
      %c0_15 = arith.constant 0 : index
      %c0_16 = arith.constant 0 : index
      %42 = vector.load %arg4[%c3, %c0_15, %c0_16] : memref<9x1x256xbf16, #tpu.memory_space<vmem>>, vector<1x1x256xbf16>
      %43 = vector.shape_cast %42 : vector<1x1x256xbf16> to vector<1x256xbf16>
      %44 = vector.shape_cast %43 : vector<1x256xbf16> to vector<1x1x256xbf16>
      %45 = vector.broadcast %44 : vector<1x1x256xbf16> to vector<2x16x256xbf16>
      %46 = arith.mulf %41, %45 : vector<2x16x256xbf16>
      %c4 = arith.constant 4 : index
      %c0_17 = arith.constant 0 : index
      %c0_18 = arith.constant 0 : index
      %47 = vector.load %arg4[%c4, %c0_17, %c0_18] : memref<9x1x256xbf16, #tpu.memory_space<vmem>>, vector<1x1x256xbf16>
      %48 = vector.shape_cast %47 : vector<1x1x256xbf16> to vector<1x256xbf16>
      %49 = vector.shape_cast %48 : vector<1x256xbf16> to vector<1x1x256xbf16>
      %50 = vector.broadcast %49 : vector<1x1x256xbf16> to vector<2x16x256xbf16>
      %51 = arith.mulf %14, %50 : vector<2x16x256xbf16>
      %52 = vector.extract_strided_slice %14 {offsets = [0, 0, 1], sizes = [2, 16, 255], strides = [1, 1, 1]} : vector<2x16x256xbf16> to vector<2x16x255xbf16>
      %53 = vector.extract_strided_slice %14 {offsets = [0, 0, 0], sizes = [2, 16, 1], strides = [1, 1, 1]} : vector<2x16x256xbf16> to vector<2x16x1xbf16>
      %54 = tpu.concatenate %52, %53 in 2 : vector<2x16x255xbf16>, vector<2x16x1xbf16> -> vector<2x16x256xbf16>
      %c5 = arith.constant 5 : index
      %c0_19 = arith.constant 0 : index
      %c0_20 = arith.constant 0 : index
      %55 = vector.load %arg4[%c5, %c0_19, %c0_20] : memref<9x1x256xbf16, #tpu.memory_space<vmem>>, vector<1x1x256xbf16>
      %56 = vector.shape_cast %55 : vector<1x1x256xbf16> to vector<1x256xbf16>
      %57 = vector.shape_cast %56 : vector<1x256xbf16> to vector<1x1x256xbf16>
      %58 = vector.broadcast %57 : vector<1x1x256xbf16> to vector<2x16x256xbf16>
      %59 = arith.mulf %54, %58 : vector<2x16x256xbf16>
      %60 = vector.extract_strided_slice %14 {offsets = [0, 0, 15], sizes = [2, 16, 241], strides = [1, 1, 1]} : vector<2x16x256xbf16> to vector<2x16x241xbf16>
      %61 = vector.extract_strided_slice %14 {offsets = [0, 0, 0], sizes = [2, 16, 15], strides = [1, 1, 1]} : vector<2x16x256xbf16> to vector<2x16x15xbf16>
      %62 = tpu.concatenate %60, %61 in 2 : vector<2x16x241xbf16>, vector<2x16x15xbf16> -> vector<2x16x256xbf16>
      %c6 = arith.constant 6 : index
      %c0_21 = arith.constant 0 : index
      %c0_22 = arith.constant 0 : index
      %63 = vector.load %arg4[%c6, %c0_21, %c0_22] : memref<9x1x256xbf16, #tpu.memory_space<vmem>>, vector<1x1x256xbf16>
      %64 = vector.shape_cast %63 : vector<1x1x256xbf16> to vector<1x256xbf16>
      %65 = vector.shape_cast %64 : vector<1x256xbf16> to vector<1x1x256xbf16>
      %66 = vector.broadcast %65 : vector<1x1x256xbf16> to vector<2x16x256xbf16>
      %67 = arith.mulf %62, %66 : vector<2x16x256xbf16>
      %68 = vector.extract_strided_slice %14 {offsets = [0, 0, 16], sizes = [2, 16, 240], strides = [1, 1, 1]} : vector<2x16x256xbf16> to vector<2x16x240xbf16>
      %69 = vector.extract_strided_slice %14 {offsets = [0, 0, 0], sizes = [2, 16, 16], strides = [1, 1, 1]} : vector<2x16x256xbf16> to vector<2x16x16xbf16>
      %70 = tpu.concatenate %68, %69 in 2 : vector<2x16x240xbf16>, vector<2x16x16xbf16> -> vector<2x16x256xbf16>
      %c7 = arith.constant 7 : index
      %c0_23 = arith.constant 0 : index
      %c0_24 = arith.constant 0 : index
      %71 = vector.load %arg4[%c7, %c0_23, %c0_24] : memref<9x1x256xbf16, #tpu.memory_space<vmem>>, vector<1x1x256xbf16>
      %72 = vector.shape_cast %71 : vector<1x1x256xbf16> to vector<1x256xbf16>
      %73 = vector.shape_cast %72 : vector<1x256xbf16> to vector<1x1x256xbf16>
      %74 = vector.broadcast %73 : vector<1x1x256xbf16> to vector<2x16x256xbf16>
      %75 = arith.mulf %70, %74 : vector<2x16x256xbf16>
      %76 = vector.extract_strided_slice %14 {offsets = [0, 0, 17], sizes = [2, 16, 239], strides = [1, 1, 1]} : vector<2x16x256xbf16> to vector<2x16x239xbf16>
      %77 = vector.extract_strided_slice %14 {offsets = [0, 0, 0], sizes = [2, 16, 17], strides = [1, 1, 1]} : vector<2x16x256xbf16> to vector<2x16x17xbf16>
      %78 = tpu.concatenate %76, %77 in 2 : vector<2x16x239xbf16>, vector<2x16x17xbf16> -> vector<2x16x256xbf16>
      %c8 = arith.constant 8 : index
      %c0_25 = arith.constant 0 : index
      %c0_26 = arith.constant 0 : index
      %79 = vector.load %arg4[%c8, %c0_25, %c0_26] : memref<9x1x256xbf16, #tpu.memory_space<vmem>>, vector<1x1x256xbf16>
      %80 = vector.shape_cast %79 : vector<1x1x256xbf16> to vector<1x256xbf16>
      %81 = vector.shape_cast %80 : vector<1x256xbf16> to vector<1x1x256xbf16>
      %82 = vector.broadcast %81 : vector<1x1x256xbf16> to vector<2x16x256xbf16>
      %83 = arith.mulf %78, %82 : vector<2x16x256xbf16>
      %84 = tpu.concatenate %22, %30, %38, %46, %51, %59, %67, %75, %83 in 1 : vector<2x16x256xbf16>, vector<2x16x256xbf16>, vector<2x16x256xbf16>, vector<2x16x256xbf16>, vector<2x16x256xbf16>, vector<2x16x256xbf16>, vector<2x16x256xbf16>, vector<2x16x256xbf16>, vector<2x16x256xbf16> -> vector<2x144x256xbf16>
      %c0_27 = arith.constant 0 : index
      %c0_28 = arith.constant 0 : index
      %85 = vector.load %arg3[%c0_27, %c0_28] : memref<8x144xbf16, #tpu.memory_space<vmem>>, vector<8x144xbf16>
      %86 = vector.shape_cast %85 : vector<8x144xbf16> to vector<1x8x144xbf16>
      %87 = vector.broadcast %86 : vector<1x8x144xbf16> to vector<2x8x144xbf16>
      "tpu.trace_start"() <{level = 10 : i32, message = "bok,bkp->bop"}> : () -> ()
      %cst = arith.constant dense<0.000000e+00> : vector<2x8x256xf32>
      %88 = tpu.matmul %87, %84, %cst {dimension_numbers = #tpu.dot_dimension_numbers<[2], [1], [1], [2], [0, 0, 0, 1, 1, 2], [0], [0]>} : vector<2x8x144xbf16>, vector<2x144x256xbf16>, vector<2x8x256xf32> -> vector<2x8x256xf32>
      "tpu.trace_stop"() : () -> ()
      %89 = arith.index_cast %1 : i32 to index
      %c0_29 = arith.constant 0 : index
      %c0_30 = arith.constant 0 : index
      %90 = vector.load %arg8[%89, %c0_29, %c0_30] : memref<2x8x256xf32, #tpu.memory_space<vmem>>, vector<2x8x256xf32>
      tpu.vector_store %arg8[%89, %c0_29, %c0_30], %88 {strides = array<i32>} : memref<2x8x256xf32, #tpu.memory_space<vmem>>, vector<2x8x256xf32>,
      %c0_31 = arith.constant 0 : index
      %c0_32 = arith.constant 0 : index
      %91 = vector.load %arg9[%c0_31, %c0_32] : memref<8x1xf32, #tpu.memory_space<vmem>>, vector<8x1xf32>
      %cst_33 = arith.constant dense<0.000000e+00> : vector<2x8xf32>
      %92 = vector.multi_reduction <add>, %88, %cst_33 [2] : vector<2x8x256xf32> to vector<2x8xf32>
      %93 = vector.shape_cast %92 : vector<2x8xf32> to vector<2x8x1xf32>
      %cst_34 = arith.constant dense<0.000000e+00> : vector<8x1xf32>
      %94 = vector.multi_reduction <add>, %93, %cst_34 [0] : vector<2x8x1xf32> to vector<8x1xf32>
      %95 = arith.addf %91, %94 : vector<8x1xf32>
      %c0_35 = arith.constant 0 : index
      %c0_36 = arith.constant 0 : index
      %96 = vector.load %arg9[%c0_35, %c0_36] : memref<8x1xf32, #tpu.memory_space<vmem>>, vector<8x1xf32>
      tpu.vector_store %arg9[%c0_35, %c0_36], %95 {strides = array<i32>} : memref<8x1xf32, #tpu.memory_space<vmem>>, vector<8x1xf32>,
    } else {
    }
    %c1_i32 = arith.constant 1 : i32
    %5 = arith.cmpi eq, %arg0, %c1_i32 : i32
    %6 = arith.extui %5 : i1 to i32
    %c0_i32_1 = arith.constant 0 : i32
    %7 = arith.cmpi ne, %6, %c0_i32_1 : i32
    scf.if %7 {
      %c0_i32_4 = arith.constant 0 : i32
      %11 = arith.cmpi eq, %arg1, %c0_i32_4 : i32
      %12 = arith.extui %11 : i1 to i32
      %c0_i32_5 = arith.constant 0 : i32
      %13 = arith.cmpi ne, %12, %c0_i32_5 : i32
      scf.if %13 {
        %c0_14 = arith.constant 0 : index
        %c0_15 = arith.constant 0 : index
        %27 = vector.load %arg9[%c0_14, %c0_15] : memref<8x1xf32, #tpu.memory_space<vmem>>, vector<8x1xf32>
        %cst_16 = arith.constant 0.001953125 : f32
        %28 = vector.broadcast %cst_16 : f32 to vector<8x1xf32>
        %29 = arith.mulf %27, %28 : vector<8x1xf32>
        %c0_17 = arith.constant 0 : index
        %c0_18 = arith.constant 0 : index
        %30 = vector.load %arg11[%c0_17, %c0_18] : memref<8x1xf32, #tpu.memory_space<vmem>>, vector<8x1xf32>
        tpu.vector_store %arg11[%c0_17, %c0_18], %29 {strides = array<i32>} : memref<8x1xf32, #tpu.memory_space<vmem>>, vector<8x1xf32>,
      } else {
      }
      %14 = arith.index_cast %1 : i32 to index
      %c0 = arith.constant 0 : index
      %c0_6 = arith.constant 0 : index
      %15 = vector.load %arg8[%14, %c0, %c0_6] : memref<2x8x256xf32, #tpu.memory_space<vmem>>, vector<2x8x256xf32>
      %c0_7 = arith.constant 0 : index
      %c0_8 = arith.constant 0 : index
      %16 = vector.load %arg11[%c0_7, %c0_8] : memref<8x1xf32, #tpu.memory_space<vmem>>, vector<8x1xf32>
      %17 = vector.shape_cast %16 : vector<8x1xf32> to vector<1x8x1xf32>
      %18 = vector.broadcast %17 : vector<1x8x1xf32> to vector<2x8x256xf32>
      %19 = arith.subf %15, %18 : vector<2x8x256xf32>
      %c0_9 = arith.constant 0 : index
      %c0_10 = arith.constant 0 : index
      %20 = vector.load %arg10[%c0_9, %c0_10] : memref<8x1xf32, #tpu.memory_space<vmem>>, vector<8x1xf32>
      %21 = arith.mulf %19, %19 : vector<2x8x256xf32>
      %cst = arith.constant dense<0.000000e+00> : vector<2x8xf32>
      %22 = vector.multi_reduction <add>, %21, %cst [2] : vector<2x8x256xf32> to vector<2x8xf32>
      %23 = vector.shape_cast %22 : vector<2x8xf32> to vector<2x8x1xf32>
      %cst_11 = arith.constant dense<0.000000e+00> : vector<8x1xf32>
      %24 = vector.multi_reduction <add>, %23, %cst_11 [0] : vector<2x8x1xf32> to vector<8x1xf32>
      %25 = arith.addf %20, %24 : vector<8x1xf32>
      %c0_12 = arith.constant 0 : index
      %c0_13 = arith.constant 0 : index
      %26 = vector.load %arg10[%c0_12, %c0_13] : memref<8x1xf32, #tpu.memory_space<vmem>>, vector<8x1xf32>
      tpu.vector_store %arg10[%c0_12, %c0_13], %25 {strides = array<i32>} : memref<8x1xf32, #tpu.memory_space<vmem>>, vector<8x1xf32>,
    } else {
    }
    %c2_i32_2 = arith.constant 2 : i32
    %8 = arith.cmpi eq, %arg0, %c2_i32_2 : i32
    %9 = arith.extui %8 : i1 to i32
    %c0_i32_3 = arith.constant 0 : i32
    %10 = arith.cmpi ne, %9, %c0_i32_3 : i32
    scf.if %10 {
      %c0_i32_4 = arith.constant 0 : i32
      %11 = arith.cmpi eq, %arg1, %c0_i32_4 : i32
      %12 = arith.extui %11 : i1 to i32
      %c0_i32_5 = arith.constant 0 : i32
      %13 = arith.cmpi ne, %12, %c0_i32_5 : i32
      scf.if %13 {
        %c0_17 = arith.constant 0 : index
        %c0_18 = arith.constant 0 : index
        %34 = vector.load %arg10[%c0_17, %c0_18] : memref<8x1xf32, #tpu.memory_space<vmem>>, vector<8x1xf32>
        %cst_19 = arith.constant 0.001953125 : f32
        %35 = vector.broadcast %cst_19 : f32 to vector<8x1xf32>
        %36 = arith.mulf %34, %35 : vector<8x1xf32>
        %c0_20 = arith.constant 0 : index
        %c0_21 = arith.constant 0 : index
        %37 = vector.load %arg5[%c0_20, %c0_21] : memref<8x1xf32, #tpu.memory_space<vmem>>, vector<8x1xf32>
        %cst_22 = arith.constant 9.99999974E-6 : f32
        %38 = vector.broadcast %cst_22 : f32 to vector<8x1xf32>
        %39 = arith.addf %36, %38 : vector<8x1xf32>
        %40 = math.rsqrt %39 : vector<8x1xf32>
        %41 = arith.mulf %37, %40 : vector<8x1xf32>
        %c0_23 = arith.constant 0 : index
        %c0_24 = arith.constant 0 : index
        %42 = vector.load %arg12[%c0_23, %c0_24] : memref<8x1xf32, #tpu.memory_space<vmem>>, vector<8x1xf32>
        tpu.vector_store %arg12[%c0_23, %c0_24], %41 {strides = array<i32>} : memref<8x1xf32, #tpu.memory_space<vmem>>, vector<8x1xf32>,
        %c0_25 = arith.constant 0 : index
        %c0_26 = arith.constant 0 : index
        %43 = vector.load %arg6[%c0_25, %c0_26] : memref<8x1xf32, #tpu.memory_space<vmem>>, vector<8x1xf32>
        %c0_27 = arith.constant 0 : index
        %c0_28 = arith.constant 0 : index
        %44 = vector.load %arg11[%c0_27, %c0_28] : memref<8x1xf32, #tpu.memory_space<vmem>>, vector<8x1xf32>
        %45 = arith.mulf %44, %41 : vector<8x1xf32>
        %46 = arith.subf %43, %45 : vector<8x1xf32>
        %c0_29 = arith.constant 0 : index
        %c0_30 = arith.constant 0 : index
        %47 = vector.load %arg13[%c0_29, %c0_30] : memref<8x1xf32, #tpu.memory_space<vmem>>, vector<8x1xf32>
        tpu.vector_store %arg13[%c0_29, %c0_30], %46 {strides = array<i32>} : memref<8x1xf32, #tpu.memory_space<vmem>>, vector<8x1xf32>,
      } else {
      }
      %14 = arith.index_cast %1 : i32 to index
      %c0 = arith.constant 0 : index
      %c0_6 = arith.constant 0 : index
      %15 = vector.load %arg8[%14, %c0, %c0_6] : memref<2x8x256xf32, #tpu.memory_space<vmem>>, vector<2x8x256xf32>
      %c0_7 = arith.constant 0 : index
      %c0_8 = arith.constant 0 : index
      %16 = vector.load %arg12[%c0_7, %c0_8] : memref<8x1xf32, #tpu.memory_space<vmem>>, vector<8x1xf32>
      %17 = vector.shape_cast %16 : vector<8x1xf32> to vector<1x8x1xf32>
      %18 = vector.broadcast %17 : vector<1x8x1xf32> to vector<2x8x256xf32>
      %19 = arith.mulf %15, %18 : vector<2x8x256xf32>
      %c0_9 = arith.constant 0 : index
      %c0_10 = arith.constant 0 : index
      %20 = vector.load %arg13[%c0_9, %c0_10] : memref<8x1xf32, #tpu.memory_space<vmem>>, vector<8x1xf32>
      %21 = vector.shape_cast %20 : vector<8x1xf32> to vector<1x8x1xf32>
      %22 = vector.broadcast %21 : vector<1x8x1xf32> to vector<2x8x256xf32>
      %23 = arith.addf %19, %22 : vector<2x8x256xf32>
      %cst = arith.constant 3.000000e+00 : f32
      %24 = vector.broadcast %cst : f32 to vector<2x8x256xf32>
      %25 = arith.addf %23, %24 : vector<2x8x256xf32>
      %cst_11 = arith.constant 0.000000e+00 : f32
      %cst_12 = arith.constant 6.000000e+00 : f32
      %26 = vector.broadcast %cst_11 : f32 to vector<2x8x256xf32>
      %27 = arith.maximumf %26, %25 : vector<2x8x256xf32>
      %28 = vector.broadcast %cst_12 : f32 to vector<2x8x256xf32>
      %29 = arith.minimumf %28, %27 : vector<2x8x256xf32>
      %30 = arith.mulf %23, %29 : vector<2x8x256xf32>
      %cst_13 = arith.constant 0.166666672 : f32
      %31 = vector.broadcast %cst_13 : f32 to vector<2x8x256xf32>
      %32 = arith.mulf %30, %31 : vector<2x8x256xf32>
      %c0_14 = arith.constant 0 : index
      %c0_15 = arith.constant 0 : index
      %c0_16 = arith.constant 0 : index
      %33 = vector.load %arg7[%c0_14, %c0_15, %c0_16] : memref<2x8x256xf32, #tpu.memory_space<vmem>>, vector<2x8x256xf32>
      tpu.vector_store %arg7[%c0_14, %c0_15, %c0_16], %32 {strides = array<i32>} : memref<2x8x256xf32, #tpu.memory_space<vmem>>, vector<2x8x256xf32>,
    } else {
    }
    return
  }
  func.func @transform_0(%arg0: i32, %arg1: i32) -> (i32, i32, i32) {
    %c0_i32 = arith.constant 0 : i32
    %0 = arith.cmpi eq, %arg0, %c0_i32 : i32
    %c0_i32_0 = arith.constant 0 : i32
    %1 = arith.select %0, %arg1, %c0_i32_0 : i32
    %c0_i32_1 = arith.constant 0 : i32
    %c0_i32_2 = arith.constant 0 : i32
    %c0_i32_3 = arith.constant 0 : i32
    return %1, %c0_i32_1, %c0_i32_2 : i32, i32, i32
  }
  func.func @transform_1(%arg0: i32, %arg1: i32) -> (i32, i32) {
    %c0_i32 = arith.constant 0 : i32
    %c0_i32_0 = arith.constant 0 : i32
    %c0_i32_1 = arith.constant 0 : i32
    return %c0_i32, %c0_i32_0 : i32, i32
  }
  func.func @transform_2(%arg0: i32, %arg1: i32) -> (i32, i32, i32) {
    %c0_i32 = arith.constant 0 : i32
    %c0_i32_0 = arith.constant 0 : i32
    %c0_i32_1 = arith.constant 0 : i32
    %c0_i32_2 = arith.constant 0 : i32
    return %c0_i32, %c0_i32_0, %c0_i32_1 : i32, i32, i32
  }
  func.func @transform_3(%arg0: i32, %arg1: i32) -> (i32, i32) {
    %c0_i32 = arith.constant 0 : i32
    %c0_i32_0 = arith.constant 0 : i32
    %c0_i32_1 = arith.constant 0 : i32
    return %c0_i32, %c0_i32_0 : i32, i32
  }
  func.func @transform_4(%arg0: i32, %arg1: i32) -> (i32, i32) {
    %c0_i32 = arith.constant 0 : i32
    %c0_i32_0 = arith.constant 0 : i32
    %c0_i32_1 = arith.constant 0 : i32
    return %c0_i32, %c0_i32_0 : i32, i32
  }
  func.func @transform_5(%arg0: i32, %arg1: i32) -> (i32, i32, i32) {
    %c2_i32 = arith.constant 2 : i32
    %0 = arith.cmpi eq, %arg0, %c2_i32 : i32
    %c0_i32 = arith.constant 0 : i32
    %1 = arith.select %0, %arg1, %c0_i32 : i32
    %c0_i32_0 = arith.constant 0 : i32
    %c0_i32_1 = arith.constant 0 : i32
    %c0_i32_2 = arith.constant 0 : i32
    return %1, %c0_i32_0, %c0_i32_1 : i32, i32, i32
  }
}

</mosaic_0001>

<llo_original>
// kernel: tpu_custom_call.1
$region0: #{tpu_custom_call.1}
  #allocation0 [shape = 'u32[]', space=smem, size = 0x4, offset = 0x4, fixed_abs, tag = 'smem constant byte address 0x4 - core index']
  #allocation1 [shape = 'u32[72,128]{1,0:T(1,128)}', space=vmem, size = 0x9000, scoped, tag = 'internal scratch']
  #allocation2 [shape = 'f32[2,8,256]{2,1,0:T(8,128)}', space=vmem, size = 0x4000, scoped, tag = 'scratch operand']
  #allocation3 [shape = 'f32[8,1]{1,0:T(8,128)}', space=vmem, size = 0x1000, scoped, tag = 'scratch operand']
  #allocation4 [shape = 'f32[8,1]{1,0:T(8,128)}', space=vmem, size = 0x1000, scoped, tag = 'scratch operand']
  #allocation5 [shape = 'f32[8,1]{1,0:T(8,128)}', space=vmem, size = 0x1000, scoped, tag = 'scratch operand']
  #allocation6 [shape = 'f32[8,1]{1,0:T(8,128)}', space=vmem, size = 0x1000, scoped, tag = 'scratch operand']
  #allocation7 [shape = 'f32[8,1]{1,0:T(8,128)}', space=vmem, size = 0x1000, scoped, tag = 'scratch operand']
  %s0 = inlined_call_operand.vmem [shape: bf16[2,16,256], index: 0, kind: input, shape index: {}]
  %s1 = inlined_call_operand.hbm [shape: bf16[8,144], index: 1, kind: input, shape index: {}]
  %s2 = inlined_call_operand.vmem [shape: bf16[9,1,256], index: 2, kind: input, shape index: {}]
  %s3 = inlined_call_operand.vmem [shape: f32[8,1], index: 3, kind: input, shape index: {}]
  %s4 = inlined_call_operand.vmem [shape: f32[8,1], index: 4, kind: input, shape index: {}]
  %s5 = inlined_call_operand.hbm [shape: f32[2,8,256], index: 5, kind: output, shape index: {}]
  %s6 = sld [smem:[#allocation0]]
  $region81: #{tpu_custom_call.1} parent=0
    _
  %s8 = ssub.s32 1, %s6
  %s9 = scalar_select 0, %s8, %s6
  $region1: #{tpu_custom_call.1} parent=0
    #allocation8 [shape = 'u8[4096]{0}', space=vmem, size = 0x1000, scoped, tag = 'input window, operand 1, single buffered']
    #allocation9 [shape = 's32[2]{0}', space=sflag, size = 0x8, scoped, tag = 'scoped memory for tpu_custom_call.1']
    #allocation10 [shape = 's32[2]{0}', space=sflag, size = 0x8, scoped, tag = 'scoped memory for tpu_custom_call.1']
    #allocation11 [shape = 'u8[32768]{0}', space=vmem, size = 0x8000, scoped, tag = 'output window, operand 0']
    %10 = vsyncpa [#allocation9], 0
    %11 = vsyncpa [#allocation10], 0
    %s12 = scalar_lea.sflag [#allocation10], 1
    %13 = vsyncpa %s12, 0
    loop: start=0, step=1, limit=5
    $region2: #{tpu_custom_call.1} parent=1 // loop_pre_header
      _
    $region3: #{tpu_custom_call.1} parent=1 // loop_header
      %s15 = sphi 0, %s19
      %p16 = scmp.ge.s32.totalorder %s15, 5
      %s22 = sphi 0, %s34
      %s23 = sphi 0, %s30
      %s24 = sphi 0, %s22
      %s25 = sphi 0, %s23
      %s26 = sphi 0, %s24
      %s27 = sphi 0, %s25
      %s41 = sphi 0, %s43
      %s44 = sphi 0, %s41
      %s45 = sphi 0, %s44
      %s61 = sphi 0, %s45
      %s65 = sphi 0, %s65
      %s67 = sphi 0, %s65
      %s68 = sphi 0, %s67
      %s82 = sphi 0, %s68
      %s86 = sphi 0, %s86
      %s88 = sphi 0, %s86
      %s89 = sphi 0, %s88
      %s103 = sphi 0, %s89
      %s107 = sphi 0, %s107
      %s109 = sphi 0, %s107
      %s110 = sphi 0, %s109
      %s124 = sphi 0, %s110
      %s128 = sphi 0, %s128
      %s130 = sphi 0, %s128
      %s131 = sphi 0, %s130
      %s145 = sphi 0, %s131
      %s155 = sphi 0, %s157
      %s158 = sphi 0, %s155
      %s159 = sphi 0, %s158
      %s175 = sphi 0, %s159
    $region4: #{tpu_custom_call.1} parent=1 // loop_header_branch
      %18 = sbr.rel (%p16) target = $region8
    $region5: #{tpu_custom_call.1} parent=1 // loop_body
      %s20 = ssub.s32 %s15, 1
      %s21 = ssub.s32 %s15, 2
      %s28 = sadd.s32 1, %s23
      %p29 = scmp.ge.s32.totalorder %s28, 1
      %s30 = scalar_select %p29, 0, %s28
      %s31 = sadd.s32 1, %s22
      %s32 = scalar_select %p29, %s31, %s22
      %p33 = scmp.ge.s32.totalorder %s32, 3
      %s34 = scalar_select %p33, 0, %s32
      %p35 = scmp.eq.s32.totalorder %s22, 0
      %s36 = scalar_select %p35, %s23, 0
      %p37 = scmp.eq.s32.totalorder %s34, 0
      %s38 = scalar_select %p37, %s30, 0
      %s39 = ssub.s32 %s36, %s38
      %p40 = scmp.eq.s32.totalorder %s39, 0
      %s42 = sadd.s32 %s41, 1
      %s43 = scalar_select %p40, %s41, %s42
      %p46 = pneg %p40
      %p47 = scmp.eq.s32.totalorder %s15, 2
      %p48 = por %p46, %p47
      %p49 = scmp.ne.s32.totalorder %s41, %s44
      %p50 = scmp.eq.s32.totalorder %s15, 0
      %p51 = por %p49, %p50
      %p52 = scmp.ne.s32.totalorder %s41, %s44
      %p53 = scmp.eq.s32.totalorder %s20, 2
      %p54 = por %p52, %p53
      %p55 = scmp.ne.s32.totalorder %s44, %s45
      %p56 = scmp.eq.s32.totalorder %s20, 0
      %p57 = por %p55, %p56
      %p58 = scmp.ne.s32.totalorder %s44, %s45
      %p59 = scmp.eq.s32.totalorder %s21, 2
      %p60 = por %p58, %p59
      %p62 = scmp.ne.s32.totalorder %s45, %s61
      %p63 = scmp.eq.s32.totalorder %s21, 0
      %p64 = por %p62, %p63
      %s66 = sadd.s32 %s65, 1
      %p69 = scmp.eq.s32.totalorder %s15, 2
      %p70 = scmp.ne.s32.totalorder %s65, %s67
      %p71 = scmp.eq.s32.totalorder %s15, 0
      %p72 = por %p70, %p71
      %p73 = scmp.ne.s32.totalorder %s65, %s67
      %p74 = scmp.eq.s32.totalorder %s20, 2
      %p75 = por %p73, %p74
      %p76 = scmp.ne.s32.totalorder %s67, %s68
      %p77 = scmp.eq.s32.totalorder %s20, 0
      %p78 = por %p76, %p77
      %p79 = scmp.ne.s32.totalorder %s67, %s68
      %p80 = scmp.eq.s32.totalorder %s21, 2
      %p81 = por %p79, %p80
      %p83 = scmp.ne.s32.totalorder %s68, %s82
      %p84 = scmp.eq.s32.totalorder %s21, 0
      %p85 = por %p83, %p84
      %s87 = sadd.s32 %s86, 1
      %p90 = scmp.eq.s32.totalorder %s15, 2
      %p91 = scmp.ne.s32.totalorder %s86, %s88
      %p92 = scmp.eq.s32.totalorder %s15, 0
      %p93 = por %p91, %p92
      %p94 = scmp.ne.s32.totalorder %s86, %s88
      %p95 = scmp.eq.s32.totalorder %s20, 2
      %p96 = por %p94, %p95
      %p97 = scmp.ne.s32.totalorder %s88, %s89
      %p98 = scmp.eq.s32.totalorder %s20, 0
      %p99 = por %p97, %p98
      %p100 = scmp.ne.s32.totalorder %s88, %s89
      %p101 = scmp.eq.s32.totalorder %s21, 2
      %p102 = por %p100, %p101
      %p104 = scmp.ne.s32.totalorder %s89, %s103
      %p105 = scmp.eq.s32.totalorder %s21, 0
      %p106 = por %p104, %p105
      %s108 = sadd.s32 %s107, 1
      %p111 = scmp.eq.s32.totalorder %s15, 2
      %p112 = scmp.ne.s32.totalorder %s107, %s109
      %p113 = scmp.eq.s32.totalorder %s15, 0
      %p114 = por %p112, %p113
      %p115 = scmp.ne.s32.totalorder %s107, %s109
      %p116 = scmp.eq.s32.totalorder %s20, 2
      %p117 = por %p115, %p116
      %p118 = scmp.ne.s32.totalorder %s109, %s110
      %p119 = scmp.eq.s32.totalorder %s20, 0
      %p120 = por %p118, %p119
      %p121 = scmp.ne.s32.totalorder %s109, %s110
      %p122 = scmp.eq.s32.totalorder %s21, 2
      %p123 = por %p121, %p122
      %p125 = scmp.ne.s32.totalorder %s110, %s124
      %p126 = scmp.eq.s32.totalorder %s21, 0
      %p127 = por %p125, %p126
      %s129 = sadd.s32 %s128, 1
      %p132 = scmp.eq.s32.totalorder %s15, 2
      %p133 = scmp.ne.s32.totalorder %s128, %s130
      %p134 = scmp.eq.s32.totalorder %s15, 0
      %p135 = por %p133, %p134
      %p136 = scmp.ne.s32.totalorder %s128, %s130
      %p137 = scmp.eq.s32.totalorder %s20, 2
      %p138 = por %p136, %p137
      %p139 = scmp.ne.s32.totalorder %s130, %s131
      %p140 = scmp.eq.s32.totalorder %s20, 0
      %p141 = por %p139, %p140
      %p142 = scmp.ne.s32.totalorder %s130, %s131
      %p143 = scmp.eq.s32.totalorder %s21, 2
      %p144 = por %p142, %p143
      %p146 = scmp.ne.s32.totalorder %s131, %s145
      %p147 = scmp.eq.s32.totalorder %s21, 0
      %p148 = por %p146, %p147
      %p149 = scmp.eq.s32.totalorder %s22, 2
      %s150 = scalar_select %p149, %s23, 0
      %p151 = scmp.eq.s32.totalorder %s34, 2
      %s152 = scalar_select %p151, %s30, 0
      %s153 = ssub.s32 %s150, %s152
      %p154 = scmp.eq.s32.totalorder %s153, 0
      %s156 = sadd.s32 %s155, 1
      %s157 = scalar_select %p154, %s155, %s156
      %p160 = pneg %p154
      %p161 = scmp.eq.s32.totalorder %s15, 2
      %p162 = por %p160, %p161
      %p163 = scmp.ne.s32.totalorder %s155, %s158
      %p164 = scmp.eq.s32.totalorder %s15, 0
      %p165 = por %p163, %p164
      %p166 = scmp.ne.s32.totalorder %s155, %s158
      %p167 = scmp.eq.s32.totalorder %s20, 2
      %p168 = por %p166, %p167
      %p169 = scmp.ne.s32.totalorder %s158, %s159
      %p170 = scmp.eq.s32.totalorder %s20, 0
      %p171 = por %p169, %p170
      %p172 = scmp.ne.s32.totalorder %s158, %s159
      %p173 = scmp.eq.s32.totalorder %s21, 2
      %p174 = por %p172, %p173
      %p176 = scmp.ne.s32.totalorder %s159, %s175
      %p177 = scmp.eq.s32.totalorder %s21, 0
      %p178 = por %p176, %p177
      %p179 = scmp.le.s32.totalorder 1, %s15
      %p180 = scmp.lt.s32.totalorder %s15, 4
      %p181 = pnand %p179, %p180
      %p182 = pneg %p181
      // Predicated region
      $region9: #{tpu_custom_call.1} parent=5 // pred_check
        _
      $region10: #{tpu_custom_call.1} parent=5 // pred_check_branch
        %184 = sbr.rel (%p181) target = $region12
      $region11: #{tpu_custom_call.1} parent=5 // pred_region
        %s185 = ssub.s32 %s15, 1
        // Predicated region
        $region13: #{tpu_custom_call.1} parent=11 // pred_check
          %p186 = pneg %p78
        $region14: #{tpu_custom_call.1} parent=11 // pred_check_branch
          %188 = sbr.rel (%p186) target = $region16
        $region15: #{tpu_custom_call.1} parent=11 // pred_region
          %190 = vsyncadd [#allocation9], 0
          %s192 = sshll.u32 %s1, 4
          %s193 = int_to_ptr.hbm [resolvable:$true] %s192
          %s194 = sshll.u32 [#allocation8], 4
          %s195 = int_to_ptr.vmem [resolvable:$true] %s194
          %197 = dma.hbm_to_vmem [thread:$0]  %s193, 128, %s195, [#allocation9]
        $region16: #{tpu_custom_call.1} parent=11 // pred_fallthru
          _
        // Predicated region
        $region17: #{tpu_custom_call.1} parent=11 // pred_check
          %p198 = pneg %p99
        $region18: #{tpu_custom_call.1} parent=11 // pred_check_branch
          %200 = sbr.rel (%p198) target = $region20
        $region19: #{tpu_custom_call.1} parent=11 // pred_region
          _
        $region20: #{tpu_custom_call.1} parent=11 // pred_fallthru
          _
        // Predicated region
        $region21: #{tpu_custom_call.1} parent=11 // pred_check
          %p201 = pneg %p120
        $region22: #{tpu_custom_call.1} parent=11 // pred_check_branch
          %203 = sbr.rel (%p201) target = $region24
        $region23: #{tpu_custom_call.1} parent=11 // pred_region
          _
        $region24: #{tpu_custom_call.1} parent=11 // pred_fallthru
          _
        // Predicated region
        $region25: #{tpu_custom_call.1} parent=11 // pred_check
          %p204 = pneg %p141
        $region26: #{tpu_custom_call.1} parent=11 // pred_check_branch
          %206 = sbr.rel (%p204) target = $region28
        $region27: #{tpu_custom_call.1} parent=11 // pred_region
          _
        $region28: #{tpu_custom_call.1} parent=11 // pred_fallthru
          _
      $region12: #{tpu_custom_call.1} parent=5 // pred_fallthru
        _
      %p207 = scmp.lt.s32.totalorder %s15, 3
      // Predicated region
      $region29: #{tpu_custom_call.1} parent=5 // pred_check
        %p208 = pneg %p207
      $region30: #{tpu_custom_call.1} parent=5 // pred_check_branch
        %210 = sbr.rel (%p208) target = $region32
      $region31: #{tpu_custom_call.1} parent=5 // pred_region
        // Predicated region
        $region33: #{tpu_custom_call.1} parent=31 // pred_check
          %p211 = pneg %p51
        $region34: #{tpu_custom_call.1} parent=31 // pred_check_branch
          %213 = sbr.rel (%p211) target = $region36
        $region35: #{tpu_custom_call.1} parent=31 // pred_region
          %p214 = scmp.eq.s32.totalorder %s22, 0
          %s215 = scalar_select %p214, %s23, 0
          %s216 = smul.u32 2, %s215
          %p217 = scmp.lt.s32.totalorder %s216, 1
          %s218 = scalar_select %p217, %s216, 1
          %s219 = smul.addr %s218, 4
          %s220 = smul.addr %s219, 4
          %s221 = scalar_lea.vmem %s0, %s220
          %p222 = scmp.eq.s32.totalorder %s22, 0
          %s223 = scalar_select %p222, %s23, 0
          %s224 = smul.u32 2, %s223
        $region36: #{tpu_custom_call.1} parent=31 // pred_fallthru
          _
      $region32: #{tpu_custom_call.1} parent=5 // pred_fallthru
        _
      %p225 = scmp.le.s32.totalorder 1, %s15
      %p226 = scmp.lt.s32.totalorder %s15, 4
      %p227 = pnand %p225, %p226
      %p228 = pneg %p227
      // Predicated region
      $region37: #{tpu_custom_call.1} parent=5 // pred_check
        _
      $region38: #{tpu_custom_call.1} parent=5 // pred_check_branch
        %230 = sbr.rel (%p227) target = $region40
      $region39: #{tpu_custom_call.1} parent=5 // pred_region
        %s231 = ssub.s32 %s15, 1
        // Predicated region
        $region41: #{tpu_custom_call.1} parent=39 // pred_check
          %p232 = pneg %p78
        $region42: #{tpu_custom_call.1} parent=39 // pred_check_branch
          %234 = sbr.rel (%p232) target = $region44
        $region43: #{tpu_custom_call.1} parent=39 // pred_region
          %236 = dma.done [#allocation9], 128
        $region44: #{tpu_custom_call.1} parent=39 // pred_fallthru
          _
        %p237 = scmp.eq.s32.totalorder %s24, 0
        %s238 = scalar_select %p237, %s25, 0
        %s239 = smul.u32 2, %s238
        %p240 = scmp.lt.s32.totalorder %s239, 1
        %s241 = scalar_select %p240, %s239, 1
        %s242 = smul.addr %s241, 4
        %s243 = smul.addr %s242, 4
        %s244 = scalar_lea.vmem %s0, %s243
        %p245 = pneg %p57
        %p246 = pneg %p54
        %p247 = pneg %p78
        %p248 = pneg %p75
        %p249 = pneg %p99
        %p250 = pneg %p96
        %p251 = pneg %p120
        %p252 = pneg %p117
        %p253 = pneg %p141
        %p254 = pneg %p138
        %p255 = pneg %p171
        %p256 = pneg %p168
        %s257 = sand.u32 %s158, 1
        %s258 = scalar_lea.sflag [#allocation10], %s257
        %s259 = sand.u32 %s158, 1
        %s260 = smul.addr %s259, 32
        %s261 = scalar_lea.vmem [#allocation11], %s260
        %p262 = scmp.eq.s32.totalorder %s24, 0
        %s263 = scalar_select %p262, %s25, 0
        %s264 = smul.u32 2, %s263
        %p265 = scmp.lt.s32.totalorder %s264, 1
        %s266 = scalar_select %p265, %s264, 1
        %s267 = smul.addr %s266, 4
        %s268 = smul.addr %s267, 4
        %s269 = scalar_lea.vmem %s0, %s268
        %p270 = scmp.eq.s32.totalorder %s24, 0
        %s271 = scalar_select %p270, %s25, 0
        %s272 = smul.u32 2, %s271
        %p273 = scmp.eq.s32.totalorder %s24, 2
        %s274 = scalar_select %p273, %s25, 0
        %s275 = smul.u32 2, %s274
        %s277 = smul.u32 %s25, 2
        %p278 = scmp.eq.s32.totalorder %s24, 0
        // Predicated region
        $region45: #{tpu_custom_call.1} parent=39 // pred_check
          %p279 = pneg %p278
        $region46: #{tpu_custom_call.1} parent=39 // pred_check_branch
          %281 = sbr.rel (%p279) target = $region48
        $region47: #{tpu_custom_call.1} parent=39 // pred_region
          %p282 = scmp.eq.s32.totalorder %s25, 0
          // Predicated region
          $region49: #{tpu_custom_call.1} parent=47 // pred_check
            %p283 = pneg %p282
          $region50: #{tpu_custom_call.1} parent=47 // pred_check_branch
            %285 = sbr.rel (%p283) target = $region52
          $region51: #{tpu_custom_call.1} parent=47 // pred_region
            %vm286 = vcmask 7168
            %287 = vst.msk [vmem:[#allocation3] sm:$0xff] %vm286, 0.0
            %288 = vst.msk [vmem:[#allocation4] sm:$0xff] %vm286, 0.0
          $region52: #{tpu_custom_call.1} parent=47 // pred_fallthru
            _
          %v289 = vld [vmem:[%s269] sm:$0xff]
          %v290 = vld [vmem:[%s269 + $0x8] sm:$0xff]
          %v291 = vld [vmem:[%s269 + $0x10] sm:$0xff]
          %v292 = vld [vmem:[%s269 + $0x18] sm:$0xff]
          %v297 = vunpack.c.h.b16 %v289
          %v298 = vunpack.c.h.b16 %v290
          %v299 = vunpack.c.h.b16 %v291
          %v300 = vunpack.c.h.b16 %v292
          %v301 = vpack.c.b16 %v298, %v297
          %v302 = vpack.c.b16 %v300, %v299
          %303 = vrot.lane.b32.xlu0 %v301, 17
          %v304 = vpop.permute.xlu0 %303
          %305 = vrot.lane.b32.xlu0 %v302, 17
          %v306 = vpop.permute.xlu0 %305
          %v307 = vunpack.c.l.b16 %v289
          %v308 = vunpack.c.l.b16 %v290
          %v309 = vunpack.c.l.b16 %v291
          %v310 = vunpack.c.l.b16 %v292
          %v311 = vpack.c.b16 %v308, %v307
          %v312 = vpack.c.b16 %v310, %v309
          %313 = vrot.lane.b32.xlu0 %v311, 17
          %v314 = vpop.permute.xlu0 %313
          %315 = vrot.lane.b32.xlu0 %v312, 17
          %v316 = vpop.permute.xlu0 %315
          %vm317 = vcmask 138240
          %v318 = vsel %vm317, %v314, %v304
          %v319 = vsel %vm317, %v316, %v306
          %vm322 = vcmask 138240
          %v325 = vsel %vm322, %v304, %v314
          %v329 = vsel %vm322, %v306, %v316
          %v331 = vld [vmem:[%s2] sm:$0x3]
          %333 = vst [vmem:[#allocation1] ss:$9 sm:$0xff] %v331
          %v334 = vld [vmem:[#allocation1] sm:$0xff]
          %v335 = vld [vmem:[#allocation1 + $0x9] sm:$0xff]
          %v336 = vpack.i.b16 %v334, %v334
          %v338 = vperm.slane %v336, 0
          %v339 = vpack.i.b16 %v335, %v335
          %v341 = vperm.slane %v339, 0
          %v342 = vunpack.c.l.bf16 %v325
          %v343 = vunpack.c.l.bf16 %v318
          %v344 = vunpack.c.h.bf16 %v325
          %v345 = vunpack.c.h.bf16 %v318
          %v346 = vunpack.c.l.bf16 %v329
          %v347 = vunpack.c.l.bf16 %v319
          %v348 = vunpack.c.h.bf16 %v329
          %v349 = vunpack.c.h.bf16 %v319
          %v350 = vunpack.c.l.bf16 %v338
          %v351 = vunpack.c.l.bf16 %v341
          %v352 = vmul.f32 %v342, %v350
          %v353 = vmul.f32 %v343, %v351
          %v354 = vmul.f32 %v344, %v350
          %v355 = vmul.f32 %v345, %v351
          %v356 = vmul.f32 %v346, %v350
          %v357 = vmul.f32 %v347, %v351
          %v358 = vmul.f32 %v348, %v350
          %v359 = vmul.f32 %v349, %v351
          %v360 = vpack.c.bf16 %v353, %v352
          %v361 = vpack.c.bf16 %v355, %v354
          %v362 = vpack.c.bf16 %v357, %v356
          %v363 = vpack.c.bf16 %v359, %v358
          %364 = vrot.lane.b32.xlu0 %v301, 16
          %v365 = vpop.permute.xlu0 %364
          %366 = vrot.lane.b32.xlu0 %v302, 16
          %v367 = vpop.permute.xlu0 %366
          %368 = vrot.lane.b32.xlu0 %v311, 16
          %v369 = vpop.permute.xlu0 %368
          %370 = vrot.lane.b32.xlu0 %v312, 16
          %v371 = vpop.permute.xlu0 %370
          %vm372 = vcmask 130048
          %v373 = vsel %vm372, %v369, %v365
          %v374 = vsel %vm372, %v371, %v367
          %vm377 = vcmask 130048
          %v380 = vsel %vm377, %v365, %v369
          %v384 = vsel %vm377, %v367, %v371
          %s386 = scalar_lea.vmem %s2, 2
          %v387 = vld [vmem:[%s386] sm:$0x3]
          %389 = vst [vmem:[#allocation1] ss:$9 sm:$0xff] %v387
          %v390 = vld [vmem:[#allocation1] sm:$0xff]
          %v391 = vld [vmem:[#allocation1 + $0x9] sm:$0xff]
          %v392 = vpack.i.b16 %v390, %v390
          %v394 = vperm.slane %v392, 0
          %v395 = vpack.i.b16 %v391, %v391
          %v397 = vperm.slane %v395, 0
          %v398 = vunpack.c.l.bf16 %v380
          %v399 = vunpack.c.l.bf16 %v373
          %v400 = vunpack.c.h.bf16 %v380
          %v401 = vunpack.c.h.bf16 %v373
          %v402 = vunpack.c.l.bf16 %v384
          %v403 = vunpack.c.l.bf16 %v374
          %v404 = vunpack.c.h.bf16 %v384
          %v405 = vunpack.c.h.bf16 %v374
          %v406 = vunpack.c.l.bf16 %v394
          %v407 = vunpack.c.l.bf16 %v397
          %v408 = vmul.f32 %v398, %v406
          %v409 = vmul.f32 %v399, %v407
          %v410 = vmul.f32 %v400, %v406
          %v411 = vmul.f32 %v401, %v407
          %v412 = vmul.f32 %v402, %v406
          %v413 = vmul.f32 %v403, %v407
          %v414 = vmul.f32 %v404, %v406
          %v415 = vmul.f32 %v405, %v407
          %v416 = vpack.c.bf16 %v409, %v408
          %v417 = vpack.c.bf16 %v411, %v410
          %v418 = vpack.c.bf16 %v413, %v412
          %v419 = vpack.c.bf16 %v415, %v414
          %420 = vrot.lane.b32.xlu0 %v301, 15
          %v421 = vpop.permute.xlu0 %420
          %422 = vrot.lane.b32.xlu0 %v302, 15
          %v423 = vpop.permute.xlu0 %422
          %424 = vrot.lane.b32.xlu0 %v311, 15
          %v425 = vpop.permute.xlu0 %424
          %426 = vrot.lane.b32.xlu0 %v312, 15
          %v427 = vpop.permute.xlu0 %426
          %vm428 = vcmask 121856
          %v429 = vsel %vm428, %v425, %v421
          %v430 = vsel %vm428, %v427, %v423
          %vm433 = vcmask 121856
          %v436 = vsel %vm433, %v421, %v425
          %v440 = vsel %vm433, %v423, %v427
          %s442 = scalar_lea.vmem %s2, 4
          %v443 = vld [vmem:[%s442] sm:$0x3]
          %445 = vst [vmem:[#allocation1] ss:$9 sm:$0xff] %v443
          %v446 = vld [vmem:[#allocation1] sm:$0xff]
          %v447 = vld [vmem:[#allocation1 + $0x9] sm:$0xff]
          %v448 = vpack.i.b16 %v446, %v446
          %v450 = vperm.slane %v448, 0
          %v451 = vpack.i.b16 %v447, %v447
          %v453 = vperm.slane %v451, 0
          %v454 = vunpack.c.l.bf16 %v436
          %v455 = vunpack.c.l.bf16 %v429
          %v456 = vunpack.c.h.bf16 %v436
          %v457 = vunpack.c.h.bf16 %v429
          %v458 = vunpack.c.l.bf16 %v440
          %v459 = vunpack.c.l.bf16 %v430
          %v460 = vunpack.c.h.bf16 %v440
          %v461 = vunpack.c.h.bf16 %v430
          %v462 = vunpack.c.l.bf16 %v450
          %v463 = vunpack.c.l.bf16 %v453
          %v464 = vmul.f32 %v454, %v462
          %v465 = vmul.f32 %v455, %v463
          %v466 = vmul.f32 %v456, %v462
          %v467 = vmul.f32 %v457, %v463
          %v468 = vmul.f32 %v458, %v462
          %v469 = vmul.f32 %v459, %v463
          %v470 = vmul.f32 %v460, %v462
          %v471 = vmul.f32 %v461, %v463
          %v472 = vpack.c.bf16 %v465, %v464
          %v473 = vpack.c.bf16 %v467, %v466
          %v474 = vpack.c.bf16 %v469, %v468
          %v475 = vpack.c.bf16 %v471, %v470
          %476 = vrot.lane.b32.xlu0 %v301, 1
          %v477 = vpop.permute.xlu0 %476
          %478 = vrot.lane.b32.xlu0 %v302, 1
          %v479 = vpop.permute.xlu0 %478
          %480 = vrot.lane.b32.xlu0 %v311, 1
          %v481 = vpop.permute.xlu0 %480
          %482 = vrot.lane.b32.xlu0 %v312, 1
          %v483 = vpop.permute.xlu0 %482
          %vm484 = vcmask 7168
          %v485 = vsel %vm484, %v481, %v477
          %v486 = vsel %vm484, %v483, %v479
          %vm489 = vcmask 7168
          %v492 = vsel %vm489, %v477, %v481
          %v496 = vsel %vm489, %v479, %v483
          %s498 = scalar_lea.vmem %s2, 6
          %v499 = vld [vmem:[%s498] sm:$0x3]
          %501 = vst [vmem:[#allocation1] ss:$9 sm:$0xff] %v499
          %v502 = vld [vmem:[#allocation1] sm:$0xff]
          %v503 = vld [vmem:[#allocation1 + $0x9] sm:$0xff]
          %v504 = vpack.i.b16 %v502, %v502
          %v506 = vperm.slane %v504, 0
          %v507 = vpack.i.b16 %v503, %v503
          %v509 = vperm.slane %v507, 0
          %v510 = vunpack.c.l.bf16 %v492
          %v511 = vunpack.c.l.bf16 %v485
          %v512 = vunpack.c.h.bf16 %v492
          %v513 = vunpack.c.h.bf16 %v485
          %v514 = vunpack.c.l.bf16 %v496
          %v515 = vunpack.c.l.bf16 %v486
          %v516 = vunpack.c.h.bf16 %v496
          %v517 = vunpack.c.h.bf16 %v486
          %v518 = vunpack.c.l.bf16 %v506
          %v519 = vunpack.c.l.bf16 %v509
          %v520 = vmul.f32 %v510, %v518
          %v521 = vmul.f32 %v511, %v519
          %v522 = vmul.f32 %v512, %v518
          %v523 = vmul.f32 %v513, %v519
          %v524 = vmul.f32 %v514, %v518
          %v525 = vmul.f32 %v515, %v519
          %v526 = vmul.f32 %v516, %v518
          %v527 = vmul.f32 %v517, %v519
          %v528 = vpack.c.bf16 %v521, %v520
          %v529 = vpack.c.bf16 %v523, %v522
          %v530 = vpack.c.bf16 %v525, %v524
          %v531 = vpack.c.bf16 %v527, %v526
          %s532 = scalar_lea.vmem %s2, 8
          %v533 = vld [vmem:[%s532] sm:$0x3]
          %535 = vst [vmem:[#allocation1] ss:$9 sm:$0xff] %v533
          %v536 = vld [vmem:[#allocation1] sm:$0xff]
          %v537 = vld [vmem:[#allocation1 + $0x9] sm:$0xff]
          %v538 = vpack.i.b16 %v536, %v536
          %v540 = vperm.slane %v538, 0
          %v541 = vpack.i.b16 %v537, %v537
          %v543 = vperm.slane %v541, 0
          %v544 = vunpack.c.l.bf16 %v289
          %v545 = vunpack.c.h.bf16 %v289
          %v546 = vunpack.c.l.bf16 %v290
          %v547 = vunpack.c.h.bf16 %v290
          %v548 = vunpack.c.l.bf16 %v291
          %v549 = vunpack.c.h.bf16 %v291
          %v550 = vunpack.c.l.bf16 %v292
          %v551 = vunpack.c.h.bf16 %v292
          %v552 = vunpack.c.l.bf16 %v540
          %v553 = vunpack.c.l.bf16 %v543
          %v554 = vmul.f32 %v544, %v552
          %v555 = vmul.f32 %v545, %v553
          %v556 = vmul.f32 %v546, %v552
          %v557 = vmul.f32 %v547, %v553
          %v558 = vmul.f32 %v548, %v552
          %v559 = vmul.f32 %v549, %v553
          %v560 = vmul.f32 %v550, %v552
          %v561 = vmul.f32 %v551, %v553
          %v562 = vpack.c.bf16 %v555, %v554
          %v563 = vpack.c.bf16 %v557, %v556
          %v564 = vpack.c.bf16 %v559, %v558
          %v565 = vpack.c.bf16 %v561, %v560
          %566 = vrot.lane.b32.xlu0 %v311, 127
          %v567 = vpop.permute.xlu0 %566
          %568 = vrot.lane.b32.xlu0 %v301, 127
          %v569 = vpop.permute.xlu0 %568
          %570 = vrot.lane.b32.xlu0 %v312, 127
          %v571 = vpop.permute.xlu0 %570
          %572 = vrot.lane.b32.xlu0 %v302, 127
          %v573 = vpop.permute.xlu0 %572
          %vm574 = vcmask 1039360
          %v575 = vsel %vm574, %v567, %v569
          %v576 = vsel %vm574, %v571, %v573
          %vm579 = vcmask 1039360
          %v582 = vsel %vm579, %v569, %v567
          %v586 = vsel %vm579, %v573, %v571
          %s588 = scalar_lea.vmem %s2, 10
          %v589 = vld [vmem:[%s588] sm:$0x3]
          %591 = vst [vmem:[#allocation1] ss:$9 sm:$0xff] %v589
          %v592 = vld [vmem:[#allocation1] sm:$0xff]
          %v593 = vld [vmem:[#allocation1 + $0x9] sm:$0xff]
          %v594 = vpack.i.b16 %v592, %v592
          %v596 = vperm.slane %v594, 0
          %v597 = vpack.i.b16 %v593, %v593
          %v599 = vperm.slane %v597, 0
          %v600 = vunpack.c.l.bf16 %v575
          %v601 = vunpack.c.l.bf16 %v582
          %v602 = vunpack.c.h.bf16 %v575
          %v603 = vunpack.c.h.bf16 %v582
          %v604 = vunpack.c.l.bf16 %v576
          %v605 = vunpack.c.l.bf16 %v586
          %v606 = vunpack.c.h.bf16 %v576
          %v607 = vunpack.c.h.bf16 %v586
          %v608 = vunpack.c.l.bf16 %v596
          %v609 = vunpack.c.l.bf16 %v599
          %v610 = vmul.f32 %v600, %v608
          %v611 = vmul.f32 %v601, %v609
          %v612 = vmul.f32 %v602, %v608
          %v613 = vmul.f32 %v603, %v609
          %v614 = vmul.f32 %v604, %v608
          %v615 = vmul.f32 %v605, %v609
          %v616 = vmul.f32 %v606, %v608
          %v617 = vmul.f32 %v607, %v609
          %v618 = vpack.c.bf16 %v611, %v610
          %v619 = vpack.c.bf16 %v613, %v612
          %v620 = vpack.c.bf16 %v615, %v614
          %v621 = vpack.c.bf16 %v617, %v616
          %622 = vrot.lane.b32.xlu0 %v311, 113
          %v623 = vpop.permute.xlu0 %622
          %624 = vrot.lane.b32.xlu0 %v301, 113
          %v625 = vpop.permute.xlu0 %624
          %626 = vrot.lane.b32.xlu0 %v312, 113
          %v627 = vpop.permute.xlu0 %626
          %628 = vrot.lane.b32.xlu0 %v302, 113
          %v629 = vpop.permute.xlu0 %628
          %vm630 = vcmask 924672
          %v631 = vsel %vm630, %v623, %v625
          %v632 = vsel %vm630, %v627, %v629
          %vm635 = vcmask 924672
          %v638 = vsel %vm635, %v625, %v623
          %v642 = vsel %vm635, %v629, %v627
          %s644 = scalar_lea.vmem %s2, 12
          %v645 = vld [vmem:[%s644] sm:$0x3]
          %647 = vst [vmem:[#allocation1] ss:$9 sm:$0xff] %v645
          %v648 = vld [vmem:[#allocation1] sm:$0xff]
          %v649 = vld [vmem:[#allocation1 + $0x9] sm:$0xff]
          %v650 = vpack.i.b16 %v648, %v648
          %v652 = vperm.slane %v650, 0
          %v653 = vpack.i.b16 %v649, %v649
          %v655 = vperm.slane %v653, 0
          %v656 = vunpack.c.l.bf16 %v631
          %v657 = vunpack.c.l.bf16 %v638
          %v658 = vunpack.c.h.bf16 %v631
          %v659 = vunpack.c.h.bf16 %v638
          %v660 = vunpack.c.l.bf16 %v632
          %v661 = vunpack.c.l.bf16 %v642
          %v662 = vunpack.c.h.bf16 %v632
          %v663 = vunpack.c.h.bf16 %v642
          %v664 = vunpack.c.l.bf16 %v652
          %v665 = vunpack.c.l.bf16 %v655
          %v666 = vmul.f32 %v656, %v664
          %v667 = vmul.f32 %v657, %v665
          %v668 = vmul.f32 %v658, %v664
          %v669 = vmul.f32 %v659, %v665
          %v670 = vmul.f32 %v660, %v664
          %v671 = vmul.f32 %v661, %v665
          %v672 = vmul.f32 %v662, %v664
          %v673 = vmul.f32 %v663, %v665
          %v674 = vpack.c.bf16 %v667, %v666
          %v675 = vpack.c.bf16 %v669, %v668
          %v676 = vpack.c.bf16 %v671, %v670
          %v677 = vpack.c.bf16 %v673, %v672
          %678 = vrot.lane.b32.xlu0 %v311, 112
          %v679 = vpop.permute.xlu0 %678
          %680 = vrot.lane.b32.xlu0 %v301, 112
          %v681 = vpop.permute.xlu0 %680
          %682 = vrot.lane.b32.xlu0 %v312, 112
          %v683 = vpop.permute.xlu0 %682
          %684 = vrot.lane.b32.xlu0 %v302, 112
          %v685 = vpop.permute.xlu0 %684
          %vm686 = vcmask 916480
          %v687 = vsel %vm686, %v679, %v681
          %v688 = vsel %vm686, %v683, %v685
          %vm691 = vcmask 916480
          %v694 = vsel %vm691, %v681, %v679
          %v698 = vsel %vm691, %v685, %v683
          %s700 = scalar_lea.vmem %s2, 14
          %v701 = vld [vmem:[%s700] sm:$0x3]
          %703 = vst [vmem:[#allocation1] ss:$9 sm:$0xff] %v701
          %v704 = vld [vmem:[#allocation1] sm:$0xff]
          %v705 = vld [vmem:[#allocation1 + $0x9] sm:$0xff]
          %v706 = vpack.i.b16 %v704, %v704
          %v708 = vperm.slane %v706, 0
          %v709 = vpack.i.b16 %v705, %v705
          %v711 = vperm.slane %v709, 0
          %v712 = vunpack.c.l.bf16 %v687
          %v713 = vunpack.c.l.bf16 %v694
          %v714 = vunpack.c.h.bf16 %v687
          %v715 = vunpack.c.h.bf16 %v694
          %v716 = vunpack.c.l.bf16 %v688
          %v717 = vunpack.c.l.bf16 %v698
          %v718 = vunpack.c.h.bf16 %v688
          %v719 = vunpack.c.h.bf16 %v698
          %v720 = vunpack.c.l.bf16 %v708
          %v721 = vunpack.c.l.bf16 %v711
          %v722 = vmul.f32 %v712, %v720
          %v723 = vmul.f32 %v713, %v721
          %v724 = vmul.f32 %v714, %v720
          %v725 = vmul.f32 %v715, %v721
          %v726 = vmul.f32 %v716, %v720
          %v727 = vmul.f32 %v717, %v721
          %v728 = vmul.f32 %v718, %v720
          %v729 = vmul.f32 %v719, %v721
          %v730 = vpack.c.bf16 %v723, %v722
          %v731 = vpack.c.bf16 %v725, %v724
          %v732 = vpack.c.bf16 %v727, %v726
          %v733 = vpack.c.bf16 %v729, %v728
          %734 = vrot.lane.b32.xlu0 %v311, 111
          %v735 = vpop.permute.xlu0 %734
          %736 = vrot.lane.b32.xlu0 %v301, 111
          %v737 = vpop.permute.xlu0 %736
          %738 = vrot.lane.b32.xlu0 %v312, 111
          %v739 = vpop.permute.xlu0 %738
          %740 = vrot.lane.b32.xlu0 %v302, 111
          %v741 = vpop.permute.xlu0 %740
          %vm742 = vcmask 908288
          %v743 = vsel %vm742, %v735, %v737
          %v744 = vsel %vm742, %v739, %v741
          %vm747 = vcmask 908288
          %v750 = vsel %vm747, %v737, %v735
          %v754 = vsel %vm747, %v741, %v739
          %s756 = scalar_lea.vmem %s2, 16
          %v757 = vld [vmem:[%s756] sm:$0x3]
          %759 = vst [vmem:[#allocation1] ss:$9 sm:$0xff] %v757
          %v760 = vld [vmem:[#allocation1] sm:$0xff]
          %v761 = vld [vmem:[#allocation1 + $0x9] sm:$0xff]
          %v762 = vpack.i.b16 %v760, %v760
          %v764 = vperm.slane %v762, 0
          %v765 = vpack.i.b16 %v761, %v761
          %v767 = vperm.slane %v765, 0
          %v768 = vunpack.c.l.bf16 %v743
          %v769 = vunpack.c.l.bf16 %v750
          %v770 = vunpack.c.h.bf16 %v743
          %v771 = vunpack.c.h.bf16 %v750
          %v772 = vunpack.c.l.bf16 %v744
          %v773 = vunpack.c.l.bf16 %v754
          %v774 = vunpack.c.h.bf16 %v744
          %v775 = vunpack.c.h.bf16 %v754
          %v776 = vunpack.c.l.bf16 %v764
          %v777 = vunpack.c.l.bf16 %v767
          %v778 = vmul.f32 %v768, %v776
          %v779 = vmul.f32 %v769, %v777
          %v780 = vmul.f32 %v770, %v776
          %v781 = vmul.f32 %v771, %v777
          %v782 = vmul.f32 %v772, %v776
          %v783 = vmul.f32 %v773, %v777
          %v784 = vmul.f32 %v774, %v776
          %v785 = vmul.f32 %v775, %v777
          %v786 = vpack.c.bf16 %v779, %v778
          %v787 = vpack.c.bf16 %v781, %v780
          %v788 = vpack.c.bf16 %v783, %v782
          %v789 = vpack.c.bf16 %v785, %v784
          %v794 = vunpack.c.l.b16 %v360
          %v795 = vunpack.c.h.b16 %v360
          %v796 = vunpack.c.l.b16 %v361
          %v797 = vunpack.c.h.b16 %v361
          %v798 = vunpack.c.l.b16 %v362
          %v799 = vunpack.c.h.b16 %v362
          %v800 = vunpack.c.l.b16 %v363
          %v801 = vunpack.c.h.b16 %v363
          %v802 = vpack.c.b16 %v796, %v794
          %v803 = vpack.c.b16 %v797, %v795
          %v804 = vpack.c.b16 %v800, %v798
          %v805 = vpack.c.b16 %v801, %v799
          %v814 = vunpack.c.l.b16 %v416
          %v815 = vunpack.c.h.b16 %v416
          %v816 = vunpack.c.l.b16 %v417
          %v817 = vunpack.c.h.b16 %v417
          %v818 = vunpack.c.l.b16 %v418
          %v819 = vunpack.c.h.b16 %v418
          %v820 = vunpack.c.l.b16 %v419
          %v821 = vunpack.c.h.b16 %v419
          %v822 = vpack.c.b16 %v816, %v814
          %v823 = vpack.c.b16 %v817, %v815
          %v824 = vpack.c.b16 %v820, %v818
          %v825 = vpack.c.b16 %v821, %v819
          %v834 = vunpack.c.l.b16 %v472
          %v835 = vunpack.c.h.b16 %v472
          %v836 = vunpack.c.l.b16 %v473
          %v837 = vunpack.c.h.b16 %v473
          %v838 = vunpack.c.l.b16 %v474
          %v839 = vunpack.c.h.b16 %v474
          %v840 = vunpack.c.l.b16 %v475
          %v841 = vunpack.c.h.b16 %v475
          %v842 = vpack.c.b16 %v836, %v834
          %v843 = vpack.c.b16 %v837, %v835
          %v844 = vpack.c.b16 %v840, %v838
          %v845 = vpack.c.b16 %v841, %v839
          %v854 = vunpack.c.l.b16 %v528
          %v855 = vunpack.c.h.b16 %v528
          %v856 = vunpack.c.l.b16 %v529
          %v857 = vunpack.c.h.b16 %v529
          %v858 = vunpack.c.l.b16 %v530
          %v859 = vunpack.c.h.b16 %v530
          %v860 = vunpack.c.l.b16 %v531
          %v861 = vunpack.c.h.b16 %v531
          %v862 = vpack.c.b16 %v856, %v854
          %v863 = vpack.c.b16 %v857, %v855
          %v864 = vpack.c.b16 %v860, %v858
          %v865 = vpack.c.b16 %v861, %v859
          %v874 = vunpack.c.l.b16 %v562
          %v875 = vunpack.c.h.b16 %v562
          %v876 = vunpack.c.l.b16 %v563
          %v877 = vunpack.c.h.b16 %v563
          %v878 = vunpack.c.l.b16 %v564
          %v879 = vunpack.c.h.b16 %v564
          %v880 = vunpack.c.l.b16 %v565
          %v881 = vunpack.c.h.b16 %v565
          %v882 = vpack.c.b16 %v876, %v874
          %v883 = vpack.c.b16 %v877, %v875
          %v884 = vpack.c.b16 %v880, %v878
          %v885 = vpack.c.b16 %v881, %v879
          %v894 = vunpack.c.l.b16 %v618
          %v895 = vunpack.c.h.b16 %v618
          %v896 = vunpack.c.l.b16 %v619
          %v897 = vunpack.c.h.b16 %v619
          %v898 = vunpack.c.l.b16 %v620
          %v899 = vunpack.c.h.b16 %v620
          %v900 = vunpack.c.l.b16 %v621
          %v901 = vunpack.c.h.b16 %v621
          %v902 = vpack.c.b16 %v896, %v894
          %v903 = vpack.c.b16 %v897, %v895
          %v904 = vpack.c.b16 %v900, %v898
          %v905 = vpack.c.b16 %v901, %v899
          %v914 = vunpack.c.l.b16 %v674
          %v915 = vunpack.c.h.b16 %v674
          %v916 = vunpack.c.l.b16 %v675
          %v917 = vunpack.c.h.b16 %v675
          %v918 = vunpack.c.l.b16 %v676
          %v919 = vunpack.c.h.b16 %v676
          %v920 = vunpack.c.l.b16 %v677
          %v921 = vunpack.c.h.b16 %v677
          %v922 = vpack.c.b16 %v916, %v914
          %v923 = vpack.c.b16 %v917, %v915
          %v924 = vpack.c.b16 %v920, %v918
          %v925 = vpack.c.b16 %v921, %v919
          %v934 = vunpack.c.l.b16 %v730
          %v935 = vunpack.c.h.b16 %v730
          %v936 = vunpack.c.l.b16 %v731
          %v937 = vunpack.c.h.b16 %v731
          %v938 = vunpack.c.l.b16 %v732
          %v939 = vunpack.c.h.b16 %v732
          %v940 = vunpack.c.l.b16 %v733
          %v941 = vunpack.c.h.b16 %v733
          %v942 = vpack.c.b16 %v936, %v934
          %v943 = vpack.c.b16 %v937, %v935
          %v944 = vpack.c.b16 %v940, %v938
          %v945 = vpack.c.b16 %v941, %v939
          %v954 = vunpack.c.l.b16 %v786
          %v955 = vunpack.c.h.b16 %v786
          %v956 = vunpack.c.l.b16 %v787
          %v957 = vunpack.c.h.b16 %v787
          %v958 = vunpack.c.l.b16 %v788
          %v959 = vunpack.c.h.b16 %v788
          %v960 = vunpack.c.l.b16 %v789
          %v961 = vunpack.c.h.b16 %v789
          %v962 = vpack.c.b16 %v956, %v954
          %v963 = vpack.c.b16 %v957, %v955
          %v964 = vpack.c.b16 %v960, %v958
          %v965 = vpack.c.b16 %v961, %v959
          %v970 = vld [vmem:[#allocation8] sm:$0xff]
          %v972 = vunpack.c.l.b16 %v970
          %v973 = vunpack.c.h.b16 %v970
          %v974 = vpack.c.b16 %v972, %v972
          %v975 = vpack.c.b16 %v973, %v973
          %v978 = vsel %vm377, %v975, 0
          %980 = vmatpush.bf16.msra.mxu0 %v942
          %981 = vmatpush.bf16.msra.mxu0 %v922
          %982 = vmatpush.bf16.msra.mxu0 %v902
          %983 = vmatpush.bf16.msra.mxu0 %v882
          %984 = vmatpush.bf16.msra.mxu0 %v862
          %985 = vmatpush.bf16.msra.mxu0 %v842
          %986 = vmatpush.bf16.msra.mxu0 %v822
          %987 = vmatpush.bf16.msra.mxu0 %v802
          %988 = vmatmul.bf16.gmra.mxu0 %v974
          %v989 = vpop.f32.mrf.mxu0
          %v990 = vadd.f32 0.0, %v989
          %v991 = vpop.f32.mrf.mxu0
          %992 = vdwg.mxu0
          %993 = vmatpush.bf16.msra.mxu0 0
          %994 = vmatpush.bf16.msra.mxu0 0
          %995 = vmatpush.bf16.msra.mxu0 0
          %996 = vmatpush.bf16.msra.mxu0 0
          %997 = vmatpush.bf16.msra.mxu0 0
          %998 = vmatpush.bf16.msra.mxu0 0
          %999 = vmatpush.bf16.msra.mxu0 0
          %1000 = vmatpush.bf16.msra.mxu0 %v962
          %1001 = vmatmul.bf16.gmra.mxu0 %v978
          %v1002 = vpop.f32.mrf.mxu0
          %v1003 = vadd.f32 %v990, %v1002
          %v1004 = vpop.f32.mrf.mxu0
          %1005 = vdwg.mxu0
          %1006 = vmatpush.bf16.msra.mxu0 %v943
          %1007 = vmatpush.bf16.msra.mxu0 %v923
          %1008 = vmatpush.bf16.msra.mxu0 %v903
          %1009 = vmatpush.bf16.msra.mxu0 %v883
          %1010 = vmatpush.bf16.msra.mxu0 %v863
          %1011 = vmatpush.bf16.msra.mxu0 %v843
          %1012 = vmatpush.bf16.msra.mxu0 %v823
          %1013 = vmatpush.bf16.msra.mxu0 %v803
          %1014 = vmatmul.bf16.gmra.mxu0 %v974
          %v1015 = vpop.f32.mrf.mxu0
          %v1016 = vadd.f32 0.0, %v1015
          %v1017 = vpop.f32.mrf.mxu0
          %1018 = vdwg.mxu0
          %1019 = vmatpush.bf16.msra.mxu0 0
          %1020 = vmatpush.bf16.msra.mxu0 0
          %1021 = vmatpush.bf16.msra.mxu0 0
          %1022 = vmatpush.bf16.msra.mxu0 0
          %1023 = vmatpush.bf16.msra.mxu0 0
          %1024 = vmatpush.bf16.msra.mxu0 0
          %1025 = vmatpush.bf16.msra.mxu0 0
          %1026 = vmatpush.bf16.msra.mxu0 %v963
          %1027 = vmatmul.bf16.gmra.mxu0 %v978
          %v1028 = vpop.f32.mrf.mxu0
          %v1029 = vadd.f32 %v1016, %v1028
          %v1030 = vpop.f32.mrf.mxu0
          %1031 = vdwg.mxu0
          %1032 = vmatpush.bf16.msra.mxu0 %v944
          %1033 = vmatpush.bf16.msra.mxu0 %v924
          %1034 = vmatpush.bf16.msra.mxu0 %v904
          %1035 = vmatpush.bf16.msra.mxu0 %v884
          %1036 = vmatpush.bf16.msra.mxu0 %v864
          %1037 = vmatpush.bf16.msra.mxu0 %v844
          %1038 = vmatpush.bf16.msra.mxu0 %v824
          %1039 = vmatpush.bf16.msra.mxu0 %v804
          %1040 = vmatmul.bf16.gmra.mxu0 %v974
          %v1041 = vpop.f32.mrf.mxu0
          %v1042 = vadd.f32 0.0, %v1041
          %v1043 = vpop.f32.mrf.mxu0
          %1044 = vdwg.mxu0
          %1045 = vmatpush.bf16.msra.mxu0 0
          %1046 = vmatpush.bf16.msra.mxu0 0
          %1047 = vmatpush.bf16.msra.mxu0 0
          %1048 = vmatpush.bf16.msra.mxu0 0
          %1049 = vmatpush.bf16.msra.mxu0 0
          %1050 = vmatpush.bf16.msra.mxu0 0
          %1051 = vmatpush.bf16.msra.mxu0 0
          %1052 = vmatpush.bf16.msra.mxu0 %v964
          %1053 = vmatmul.bf16.gmra.mxu0 %v978
          %v1054 = vpop.f32.mrf.mxu0
          %v1055 = vadd.f32 %v1042, %v1054
          %v1056 = vpop.f32.mrf.mxu0
          %1057 = vdwg.mxu0
          %1058 = vmatpush.bf16.msra.mxu0 %v945
          %1059 = vmatpush.bf16.msra.mxu0 %v925
          %1060 = vmatpush.bf16.msra.mxu0 %v905
          %1061 = vmatpush.bf16.msra.mxu0 %v885
          %1062 = vmatpush.bf16.msra.mxu0 %v865
          %1063 = vmatpush.bf16.msra.mxu0 %v845
          %1064 = vmatpush.bf16.msra.mxu0 %v825
          %1065 = vmatpush.bf16.msra.mxu0 %v805
          %1066 = vmatmul.bf16.gmra.mxu0 %v974
          %v1067 = vpop.f32.mrf.mxu0
          %v1068 = vadd.f32 0.0, %v1067
          %v1069 = vpop.f32.mrf.mxu0
          %1070 = vdwg.mxu0
          %1071 = vmatpush.bf16.msra.mxu0 0
          %1072 = vmatpush.bf16.msra.mxu0 0
          %1073 = vmatpush.bf16.msra.mxu0 0
          %1074 = vmatpush.bf16.msra.mxu0 0
          %1075 = vmatpush.bf16.msra.mxu0 0
          %1076 = vmatpush.bf16.msra.mxu0 0
          %1077 = vmatpush.bf16.msra.mxu0 0
          %1078 = vmatpush.bf16.msra.mxu0 %v965
          %1079 = vmatmul.bf16.gmra.mxu0 %v978
          %v1080 = vpop.f32.mrf.mxu0
          %v1081 = vadd.f32 %v1068, %v1080
          %v1082 = vpop.f32.mrf.mxu0
          %1083 = vdwg.mxu0
          %s1084 = smul.u32 %s277, 2
          %s1085 = smul.addr %s1084, 8
          %s1086 = scalar_lea.vmem [#allocation2], %s1085
          %1087 = vst [vmem:[%s1086] sm:$0xff] %v1003
          %1088 = vst [vmem:[%s1086 + $0x8] sm:$0xff] %v1029
          %1089 = vst [vmem:[%s1086 + $0x10] sm:$0xff] %v1055
          %1090 = vst [vmem:[%s1086 + $0x18] sm:$0xff] %v1081
          %v1091 = vld [vmem:[#allocation3] sm:$0xff]
          %v1092 = vadd.f32 %v1003, %v1029
          %1093 = vadd.xlane.f32.xlu0 %v1092
          %v1094 = vpop.xlane.xlu0 %1093
          %v1095 = vadd.f32 %v1055, %v1081
          %1096 = vadd.xlane.f32.xlu0 %v1095
          %v1097 = vpop.xlane.xlu0 %1096
          %v1098 = vadd.f32 %v1094, %v1097
          %v1099 = vadd.f32 %v1091, %v1098
          %1100 = vst.msk [vmem:[#allocation3] sm:$0xff] %vm489, %v1099
        $region48: #{tpu_custom_call.1} parent=39 // pred_fallthru
          _
        %p1101 = scmp.eq.s32.totalorder %s24, 1
        // Predicated region
        $region53: #{tpu_custom_call.1} parent=39 // pred_check
          %p1102 = pneg %p1101
        $region54: #{tpu_custom_call.1} parent=39 // pred_check_branch
          %1104 = sbr.rel (%p1102) target = $region56
        $region55: #{tpu_custom_call.1} parent=39 // pred_region
          %p1105 = scmp.eq.s32.totalorder %s25, 0
          // Predicated region
          $region57: #{tpu_custom_call.1} parent=55 // pred_check
            %p1106 = pneg %p1105
          $region58: #{tpu_custom_call.1} parent=55 // pred_check_branch
            %1108 = sbr.rel (%p1106) target = $region60
          $region59: #{tpu_custom_call.1} parent=55 // pred_region
            %v1109 = vld [vmem:[#allocation3] sm:$0xff]
            %v1110 = vmul.f32 %v1109, 0.001953125
            %vm1111 = vcmask 7168
            %1112 = vst.msk [vmem:[#allocation5] sm:$0xff] %vm1111, %v1110
          $region60: #{tpu_custom_call.1} parent=55 // pred_fallthru
            _
          %s1113 = smul.u32 %s277, 2
          %s1114 = smul.addr %s1113, 8
          %s1115 = scalar_lea.vmem [#allocation2], %s1114
          %v1116 = vld [vmem:[%s1115] sm:$0xff]
          %v1117 = vld [vmem:[%s1115 + $0x8] sm:$0xff]
          %v1118 = vld [vmem:[%s1115 + $0x10] sm:$0xff]
          %v1119 = vld [vmem:[%s1115 + $0x18] sm:$0xff]
          %v1120 = vld [vmem:[#allocation5] sm:$0xff]
          %1122 = vset.pattern.permute.xlu0 0
          %1123 = vperm.xlu0 %1122, %v1120
          %v1124 = vpop.permute.xlu0 %1123
          %v1126 = vsub.f32 %v1116, %v1124
          %v1127 = vsub.f32 %v1117, %v1124
          %v1128 = vsub.f32 %v1118, %v1124
          %v1129 = vsub.f32 %v1119, %v1124
          %v1130 = vld [vmem:[#allocation4] sm:$0xff]
          %v1131 = vmul.f32 %v1126, %v1126
          %v1132 = vmul.f32 %v1127, %v1127
          %v1133 = vmul.f32 %v1128, %v1128
          %v1134 = vmul.f32 %v1129, %v1129
          %v1135 = vadd.f32 %v1131, %v1132
          %1136 = vadd.xlane.f32.xlu0 %v1135
          %v1137 = vpop.xlane.xlu0 %1136
          %v1138 = vadd.f32 %v1133, %v1134
          %1139 = vadd.xlane.f32.xlu0 %v1138
          %v1140 = vpop.xlane.xlu0 %1139
          %v1141 = vadd.f32 %v1137, %v1140
          %v1142 = vadd.f32 %v1130, %v1141
          %vm1143 = vcmask 7168
          %1144 = vst.msk [vmem:[#allocation4] sm:$0xff] %vm1143, %v1142
        $region56: #{tpu_custom_call.1} parent=39 // pred_fallthru
          _
        %p1145 = scmp.eq.s32.totalorder %s24, 2
        // Predicated region
        $region61: #{tpu_custom_call.1} parent=39 // pred_check
          %p1146 = pneg %p1145
        $region62: #{tpu_custom_call.1} parent=39 // pred_check_branch
          %1148 = sbr.rel (%p1146) target = $region64
        $region63: #{tpu_custom_call.1} parent=39 // pred_region
          %p1149 = scmp.eq.s32.totalorder %s25, 0
          // Predicated region
          $region65: #{tpu_custom_call.1} parent=63 // pred_check
            %p1150 = pneg %p1149
          $region66: #{tpu_custom_call.1} parent=63 // pred_check_branch
            %1152 = sbr.rel (%p1150) target = $region68
          $region67: #{tpu_custom_call.1} parent=63 // pred_region
            %v1153 = vld [vmem:[#allocation4] sm:$0xff]
            %v1154 = vmul.f32 %v1153, 0.001953125
            %v1155 = vld [vmem:[%s3] sm:$0xff]
            %v1156 = vadd.f32 %v1154, 1e-05
            %v1157 = vrsqrt.pop %v1156
            %v1158 = vmul.f32 %v1157, %v1156
            %v1159 = vmul.f32 %v1158, %v1157
            %v1160 = vmul.f32 0.5, %v1159
            %v1161 = vsub.f32 1.5, %v1160
            %v1162 = vmul.f32 %v1157, %v1161
            %vm1163 = vweird.f32 %v1156
            %vm1164 = vweird.f32 %v1157
            %vm1165 = vmor %vm1163, %vm1164
            %v1166 = vsel %vm1165, %v1157, %v1162
            %v1167 = vmul.f32 %v1155, %v1166
            %vm1168 = vcmask 7168
            %1169 = vst.msk [vmem:[#allocation6] sm:$0xff] %vm1168, %v1167
            %v1170 = vld [vmem:[%s4] sm:$0xff]
            %v1171 = vld [vmem:[#allocation5] sm:$0xff]
            %v1172 = vmul.f32 %v1171, %v1167
            %v1173 = vsub.f32 %v1170, %v1172
            %1174 = vst.msk [vmem:[#allocation7] sm:$0xff] %vm1168, %v1173
          $region68: #{tpu_custom_call.1} parent=63 // pred_fallthru
            _
          %s1175 = smul.u32 %s277, 2
          %s1176 = smul.addr %s1175, 8
          %s1177 = scalar_lea.vmem [#allocation2], %s1176
          %v1178 = vld [vmem:[%s1177] sm:$0xff]
          %v1179 = vld [vmem:[%s1177 + $0x8] sm:$0xff]
          %v1180 = vld [vmem:[%s1177 + $0x10] sm:$0xff]
          %v1181 = vld [vmem:[%s1177 + $0x18] sm:$0xff]
          %v1182 = vld [vmem:[#allocation6] sm:$0xff]
          %1184 = vset.pattern.permute.xlu0 0
          %1185 = vperm.xlu0 %1184, %v1182
          %v1186 = vpop.permute.xlu0 %1185
          %v1188 = vmul.f32 %v1178, %v1186
          %v1189 = vmul.f32 %v1179, %v1186
          %v1190 = vmul.f32 %v1180, %v1186
          %v1191 = vmul.f32 %v1181, %v1186
          %v1192 = vld [vmem:[#allocation7] sm:$0xff]
          %1194 = vset.pattern.permute.xlu0 0
          %1195 = vperm.xlu0 %1194, %v1192
          %v1196 = vpop.permute.xlu0 %1195
          %v1198 = vadd.f32 %v1188, %v1196
          %v1199 = vadd.f32 %v1189, %v1196
          %v1200 = vadd.f32 %v1190, %v1196
          %v1201 = vadd.f32 %v1191, %v1196
          %v1202 = vadd.f32 %v1198, 3.0
          %v1203 = vadd.f32 %v1199, 3.0
          %v1204 = vadd.f32 %v1200, 3.0
          %v1205 = vadd.f32 %v1201, 3.0
          %v1206 = vmax.f32 %v1202, 0.0
          %v1207 = vmax.f32 %v1203, 0.0
          %v1208 = vmax.f32 %v1204, 0.0
          %v1209 = vmax.f32 %v1205, 0.0
          %v1210 = vmin.f32 %v1206, 6.0
          %v1211 = vmin.f32 %v1207, 6.0
          %v1212 = vmin.f32 %v1208, 6.0
          %v1213 = vmin.f32 %v1209, 6.0
          %v1214 = vmul.f32 %v1198, %v1210
          %v1215 = vmul.f32 %v1199, %v1211
          %v1216 = vmul.f32 %v1200, %v1212
          %v1217 = vmul.f32 %v1201, %v1213
          %v1218 = vmul.f32 %v1214, 0.16666667
          %v1219 = vmul.f32 %v1215, 0.16666667
          %v1220 = vmul.f32 %v1216, 0.16666667
          %v1221 = vmul.f32 %v1217, 0.16666667
          %1222 = vst [vmem:[%s261] sm:$0xff] %v1218
          %1223 = vst [vmem:[%s261 + $0x8] sm:$0xff] %v1219
          %1224 = vst [vmem:[%s261 + $0x10] sm:$0xff] %v1220
          %1225 = vst [vmem:[%s261 + $0x18] sm:$0xff] %v1221
        $region64: #{tpu_custom_call.1} parent=39 // pred_fallthru
          _
        %s1226 = sand.u32 %s158, 1
        %s1227 = scalar_lea.sflag [#allocation10], %s1226
        %s1228 = sand.u32 %s158, 1
        %s1229 = smul.addr %s1228, 32
        %s1230 = scalar_lea.vmem [#allocation11], %s1229
        // Predicated region
        $region69: #{tpu_custom_call.1} parent=39 // pred_check
          %p1231 = pneg %p168
        $region70: #{tpu_custom_call.1} parent=39 // pred_check_branch
          %1233 = sbr.rel (%p1231) target = $region72
        $region71: #{tpu_custom_call.1} parent=39 // pred_region
          %p1234 = scmp.eq.s32.totalorder %s24, 2
          %s1235 = scalar_select %p1234, %s25, 0
          %s1236 = smul.u32 2, %s1235
          %1238 = vsyncadd %s1227, 0
          %s1239 = smul.addr %s1236, 2
          %s1240 = smul.addr %s1239, 8
          %s1241 = scalar_lea.hbm %s5, %s1240
          %s1242 = sshll.u32 %s1230, 4
          %s1243 = int_to_ptr.vmem [resolvable:$true] %s1242
          %s1244 = sshll.u32 %s1241, 4
          %s1245 = int_to_ptr.hbm [resolvable:$true] %s1244
          %1250 = dma.vmem_to_hbm [thread:$0]  %s1243, 512, %s1245, %s1227, 256, 256, 16
        $region72: #{tpu_custom_call.1} parent=39 // pred_fallthru
          _
      $region40: #{tpu_custom_call.1} parent=5 // pred_fallthru
        _
      %p1251 = scmp.le.s32.totalorder 2, %s15
      // Predicated region
      $region73: #{tpu_custom_call.1} parent=5 // pred_check
        %p1252 = pneg %p1251
      $region74: #{tpu_custom_call.1} parent=5 // pred_check_branch
        %1254 = sbr.rel (%p1252) target = $region76
      $region75: #{tpu_custom_call.1} parent=5 // pred_region
        %s1255 = ssub.s32 %s15, 2
        // Predicated region
        $region77: #{tpu_custom_call.1} parent=75 // pred_check
          %p1256 = pneg %p174
        $region78: #{tpu_custom_call.1} parent=75 // pred_check_branch
          %1258 = sbr.rel (%p1256) target = $region80
        $region79: #{tpu_custom_call.1} parent=75 // pred_region
          %s1259 = sand.u32 %s159, 1
          %s1260 = scalar_lea.sflag [#allocation10], %s1259
          %s1261 = sand.u32 %s159, 1
          %s1262 = smul.addr %s1261, 32
          %s1263 = scalar_lea.vmem [#allocation11], %s1262
          %1265 = dma.done %s1260, 512
        $region80: #{tpu_custom_call.1} parent=75 // pred_fallthru
          _
      $region76: #{tpu_custom_call.1} parent=5 // pred_fallthru
        _
    $region6: #{tpu_custom_call.1} parent=1 // loop_footer
      %s19 = sadd.s32 1, %s15
    $region7: #{tpu_custom_call.1} parent=1 // loop_footer_branch
      %14 = sbr.rel target = $region3
    $region8: #{tpu_custom_call.1} parent=1 // loop_exit
      _
    %1266 = vsyncpa [#allocation9], 1
    %s1267 = scalar_lea.sflag [#allocation9], 1
    %1268 = vsyncpa %s1267, 1
    %1269 = vsyncpa [#allocation10], 1
    %s1270 = scalar_lea.sflag [#allocation10], 1
    %1271 = vsyncpa %s1270, 1

</llo_original>
